<compile_context>
chip_gen: v5e
topology: v5e:2x2
jax: 0.10.0
libtpu: 0.0.40
codegen_flags: <defaults>
</compile_context>

<pallas_src>
import math

import jax
import jax.numpy as jnp
from jax.experimental import pallas as pl

# ----------------------- small GPT-2 config -----------------------
HIDDEN = 32          # n_embd
N_LAYERS = 2         # n_layer
N_HEADS = 4          # n_head
HEAD_DIM = HIDDEN // N_HEADS
MAX_SEQ = 16         # n_positions
VOCAB = 128          # vocab_size (lane-dense logits)
SEQ = 8
BATCH = 2
LN_EPS = 1e-5
MASK_VALUE = -1e9    # additive mask value (stands in for torch.finfo(f32).min)

_NT = (((1,), (1,)), ((), ()))   # contract last dims (no transpose materialized)


# ----------------------- fused Pallas kernel -----------------------
def _gpt_kernel(h_ref, mask_ref, wte_ref, wslab_ref, pslab_ref, o_ref):
    """Whole model forward for the whole batch in one kernel invocation.

    h_ref:    (B*S, H)        f32   embeddings (residual stream)
    mask_ref: (B*NH*S, S)     f32   combined causal + padding additive mask
    wte_ref:  (V, H)          bf16  tied embedding / lm_head weight
    wslab_ref:(N_LAYERS*3H,128) bf16 packed matmul weights
    pslab_ref:(N_LAYERS*4+1,128) f32 packed LN gains/biases and linear biases
    o_ref:    (B*S, V)        f32   logits (lane-dense, V=128)
    """
    h = h_ref[...]          # (BS, H) f32, VMEM-resident for the whole model
    mask = mask_ref[...]    # (B*NH*S, S)

    def layer_norm(x, g, b):
        m = jnp.mean(x, axis=-1, keepdims=True)
        v = jnp.mean((x - m) ** 2, axis=-1, keepdims=True)
        return (x - m) * jax.lax.rsqrt(v + LN_EPS) * g + b

    def gelu_new(y):
        return 0.5 * y * (1.0 + jnp.tanh(
            math.sqrt(2.0 / math.pi) * (y + 0.044715 * (y ** 3))))

    scale = 1.0 / math.sqrt(HEAD_DIM)
    H = HIDDEN

    for l in range(N_LAYERS):
        wb = l * 3 * H            # row base in bf16 weight slab
        pb = l * 4                # row base in f32 param slab
        # ---- unpack this layer's params via static ref slices (no DMA) ----
        ln1_g = pslab_ref[pb:pb + 1, 0:H]
        ln1_b = pslab_ref[pb:pb + 1, H:2 * H]
        ln2_g = pslab_ref[pb:pb + 1, 2 * H:3 * H]
        ln2_b = pslab_ref[pb:pb + 1, 3 * H:4 * H]
        bqkv = pslab_ref[pb + 1:pb + 2, 0:3 * H]
        bproj = pslab_ref[pb + 1:pb + 2, 3 * H:4 * H]
        fc_b = pslab_ref[pb + 2:pb + 3, :]
        fcp_b = pslab_ref[pb + 3:pb + 4, 0:H]
        wqkv = wslab_ref[wb:wb + H, 0:3 * H]             # (H, 3H)  bf16
        wproj = wslab_ref[wb:wb + H, 3 * H:4 * H]        # (H, H)   bf16
        fc_w = wslab_ref[wb + H:wb + 2 * H, :]           # (H, 4H)  bf16
        fcp_wT = wslab_ref[wb + 2 * H:wb + 3 * H, :]     # (H, 4H)  bf16 (fc_proj_w^T)

        # ---- attention block: one fused QKV matmul for the whole (B*S) slab ----
        x = layer_norm(h, ln1_g, ln1_b)                               # (BS, H)
        qkv = jnp.dot(x.astype(jnp.bfloat16), wqkv,
                      preferred_element_type=jnp.float32) + bqkv      # (BS, 3H)
        qkv_bf = qkv.astype(jnp.bfloat16)

        # per-(batch, head) scores stacked along sublanes -> one softmax
        s_blocks = []
        for b in range(BATCH):
            rows = slice(b * SEQ, (b + 1) * SEQ)
            for hd in range(N_HEADS):
                q = qkv_bf[rows, hd * HEAD_DIM:(hd + 1) * HEAD_DIM]
                k = qkv_bf[rows, H + hd * HEAD_DIM:H + (hd + 1) * HEAD_DIM]
                s_blocks.append(jax.lax.dot_general(
                    q, k, _NT, preferred_element_type=jnp.float32))   # (S, S)
        s = jnp.concatenate(s_blocks, axis=0)                          # (B*NH*S, S)
        s = s * scale + mask
        s = s - jnp.max(s, axis=-1, keepdims=True)
        p = jnp.exp(s)
        # exact reciprocal (approx not needed; cost negligible at (B*NH*S, 1))
        p = p * pl.reciprocal(jnp.sum(p, axis=-1, keepdims=True))
        p_bf = p.astype(jnp.bfloat16)

        # per-head attention values, re-assembled to (BS, H) for ONE projection
        o_rows = []
        for b in range(BATCH):
            rows = slice(b * SEQ, (b + 1) * SEQ)
            o_heads = []
            for hd in range(N_HEADS):
                blk = (b * N_HEADS + hd) * SEQ
                v = qkv_bf[rows,
                           2 * H + hd * HEAD_DIM:2 * H + (hd + 1) * HEAD_DIM]
                o_heads.append(jnp.dot(p_bf[blk:blk + SEQ, :], v,
                                       preferred_element_type=jnp.float32))
            o_rows.append(jnp.concatenate(o_heads, axis=-1))          # (S, H)
        o = jnp.concatenate(o_rows, axis=0)                            # (BS, H)

        attn = jnp.dot(o.astype(jnp.bfloat16), wproj,
                       preferred_element_type=jnp.float32) + bproj
        h = h + attn

        # ---- MLP block (whole batch at once) ----
        x = layer_norm(h, ln2_g, ln2_b)
        y = jnp.dot(x.astype(jnp.bfloat16), fc_w,
                    preferred_element_type=jnp.float32) + fc_b         # (BS, 4H)
        y = gelu_new(y)
        y = jax.lax.dot_general(y.astype(jnp.bfloat16), fcp_wT, _NT,
                                preferred_element_type=jnp.float32) + fcp_b
        h = h + y

    # ---- final LN + tied lm_head (x @ wte.T via NT dot_general) ----
    fb = N_LAYERS * 4
    lnf_g = pslab_ref[fb:fb + 1, 0:H]
    lnf_b = pslab_ref[fb:fb + 1, H:2 * H]
    x = layer_norm(h, lnf_g, lnf_b)
    o_ref[...] = jax.lax.dot_general(
        x.astype(jnp.bfloat16), wte_ref[...], _NT,
        preferred_element_type=jnp.float32)              # (BS, VOCAB=128) lane-dense


# ----------------------- parameters -----------------------
def init_params(key):
    keys = iter(jax.random.split(key, 4 + N_LAYERS * 8))

    def normal(shape, scale=0.02):
        return scale * jax.random.normal(next(keys), shape, dtype=jnp.float32)

    params = {
        "wte": normal((VOCAB, HIDDEN)),
        "wpe": normal((MAX_SEQ, HIDDEN)),
        "ln_f_g": jnp.ones((HIDDEN,), jnp.float32),
        "ln_f_b": jnp.zeros((HIDDEN,), jnp.float32),
        "layers": [],
    }
    for _ in range(N_LAYERS):
        params["layers"].append(dict(
            ln1_g=jnp.ones((HIDDEN,), jnp.float32),
            ln1_b=jnp.zeros((HIDDEN,), jnp.float32),
            ln2_g=jnp.ones((HIDDEN,), jnp.float32),
            ln2_b=jnp.zeros((HIDDEN,), jnp.float32),
            attn_w=normal((HIDDEN, 3 * HIDDEN)),
            attn_b=jnp.zeros((3 * HIDDEN,), jnp.float32),
            proj_w=normal((HIDDEN, HIDDEN)),
            proj_b=jnp.zeros((HIDDEN,), jnp.float32),
            fc_w=normal((HIDDEN, 4 * HIDDEN)),
            fc_b=jnp.zeros((4 * HIDDEN,), jnp.float32),
            fc_proj_w=normal((4 * HIDDEN, HIDDEN)),
            fc_proj_b=jnp.zeros((HIDDEN,), jnp.float32),
        ))
    return params


# ----------------------- forward (single fused Pallas call) -----------------------
def gpt_forward(params, input_ids, attention_mask):
    B, S = input_ids.shape
    assert B == BATCH and S == SEQ
    H = HIDDEN

    # glue: embedding gather + combined additive mask (tiny, weight/mask only)
    h0 = jnp.take(params["wte"], input_ids, axis=0) + params["wpe"][:S][None]
    h0 = h0.reshape(B * S, H)                                          # batch folded into rows

    add_mask = (1.0 - attention_mask.astype(jnp.float32)) * MASK_VALUE  # (B, S)
    row = jax.lax.broadcasted_iota(jnp.int32, (S, S), 0)
    col = jax.lax.broadcasted_iota(jnp.int32, (S, S), 1)
    causal_add = jnp.where(col <= row, 0.0, MASK_VALUE).astype(jnp.float32)
    comb = causal_add[None] + add_mask[:, None, :]                      # (B, S, S)
    mask = jnp.broadcast_to(comb[:, None], (B, N_HEADS, S, S)).reshape(
        B * N_HEADS * S, S)                                             # (B*NH*S, S)

    # ---- pack all parameters into 3 lane-dense slabs (few DMAs total) ----
    wblocks, prows = [], []
    for lp in params["layers"]:
        wblocks.append(jnp.concatenate([lp["attn_w"], lp["proj_w"]], axis=1))  # (H,128)
        wblocks.append(lp["fc_w"])                                              # (H,128)
        wblocks.append(lp["fc_proj_w"].T)                                       # (H,128)
        prows.append(jnp.concatenate(
            [lp["ln1_g"], lp["ln1_b"], lp["ln2_g"], lp["ln2_b"]]))              # 128
        prows.append(jnp.concatenate([lp["attn_b"], lp["proj_b"]]))             # 128
        prows.append(lp["fc_b"])                                                # 128
        prows.append(jnp.concatenate(
            [lp["fc_proj_b"], jnp.zeros((3 * H,), jnp.float32)]))               # 128
    prows.append(jnp.concatenate(
        [params["ln_f_g"], params["ln_f_b"], jnp.zeros((2 * H,), jnp.float32)]))
    wslab = jnp.concatenate(wblocks, axis=0).astype(jnp.bfloat16)   # (N_LAYERS*3H, 128)
    pslab = jnp.stack(prows, axis=0)                                # (N_LAYERS*4+1, 128)
    wte_bf = params["wte"].astype(jnp.bfloat16)                     # (V, H)

    # advisory cost hint so XLA doesn't serialize the tiny wrapper ops around us
    bs = B * S
    flops_layer = (2 * bs * H * 3 * H                     # qkv
                   + 2 * 2 * B * N_HEADS * S * S * HEAD_DIM   # scores + p@v
                   + 2 * bs * H * H                       # out proj
                   + 2 * 2 * bs * H * 4 * H)              # mlp fc + fc_proj
    ce = pl.CostEstimate(
        flops=N_LAYERS * flops_layer + 2 * bs * H * VOCAB,
        transcendentals=N_LAYERS * (B * N_HEADS * S * S + bs * 4 * H) + 8 * bs,
        bytes_accessed=(h0.size * 4 + mask.size * 4 + wte_bf.size * 2
                        + wslab.size * 2 + pslab.size * 4 + bs * VOCAB * 4))

    # no grid: whole-array VMEM refs, single kernel invocation for the batch
    logits = pl.pallas_call(
        _gpt_kernel,
        out_shape=jax.ShapeDtypeStruct((B * S, VOCAB), jnp.float32),
        cost_estimate=ce,
    )(h0, mask, wte_bf, wslab, pslab)
    return logits.reshape(B, S, VOCAB)


# ----------------------- pure-JAX reference (f32) -----------------------
def ref_forward(params, input_ids, attention_mask):
    B, S = input_ids.shape
    h = params["wte"][input_ids] + params["wpe"][:S][None]
    add_mask = ((1.0 - attention_mask.astype(jnp.float32)) * MASK_VALUE)
    add_mask = add_mask[:, None, None, :]

    def ln(x, g, b):
        m = x.mean(-1, keepdims=True)
        v = ((x - m) ** 2).mean(-1, keepdims=True)
        return (x - m) * jax.lax.rsqrt(v + LN_EPS) * g + b

    def gelu_new(x):
        return 0.5 * x * (1.0 + jnp.tanh(
            math.sqrt(2.0 / math.pi) * (x + 0.044715 * x ** 3)))

    causal = jnp.tril(jnp.ones((S, S), bool))
    for lp in params["layers"]:
        x = ln(h, lp["ln1_g"], lp["ln1_b"])
        qkv = x @ lp["attn_w"] + lp["attn_b"]
        q, k, v = jnp.split(qkv, 3, axis=-1)
        sh = lambda t: t.reshape(B, S, N_HEADS, HEAD_DIM).transpose(0, 2, 1, 3)
        q, k, v = sh(q), sh(k), sh(v)
        scores = (q @ k.transpose(0, 1, 3, 2)) / math.sqrt(HEAD_DIM)
        scores = jnp.where(causal, scores, MASK_VALUE) + add_mask
        p = jax.nn.softmax(scores, axis=-1)
        a = (p @ v).transpose(0, 2, 1, 3).reshape(B, S, HIDDEN)
        h = h + a @ lp["proj_w"] + lp["proj_b"]
        x = ln(h, lp["ln2_g"], lp["ln2_b"])
        x = gelu_new(x @ lp["fc_w"] + lp["fc_b"])
        h = h + x @ lp["fc_proj_w"] + lp["fc_proj_b"]
    h = ln(h, params["ln_f_g"], params["ln_f_b"])
    return h @ params["wte"].T


# ----------------------- main -----------------------
if __name__ == "__main__":
    key = jax.random.PRNGKey(0)
    pkey, ikey = jax.random.split(key)
    params = init_params(pkey)

    input_ids = jax.random.randint(ikey, (BATCH, SEQ), 0, VOCAB, dtype=jnp.int32)
    attention_mask = jnp.ones((BATCH, SEQ), jnp.int32)
    attention_mask = attention_mask.at[1, SEQ - 1].set(0)  # one padded position

    logits = jax.jit(gpt_forward)(params, input_ids, attention_mask)
    logits = jax.block_until_ready(logits)

    ref = ref_forward(params, input_ids, attention_mask)
    assert logits.shape == (BATCH, SEQ, VOCAB)
    # tolerance relaxed vs f32 reference because matmul operands are bf16
    # (MXU-native, per performance review); accumulation stays f32.
    assert jnp.allclose(logits, ref, atol=1e-2, rtol=1e-2), (
        float(jnp.max(jnp.abs(logits - ref))))

    # TODO(synk): gradient checkpointing / use_cache flags are training-loop
    # concerns with no forward-kernel equivalent; dropout is identity in eval.
    print("KERNEL_OK")
</pallas_src>

<mosaic_0001>
module attributes {stable_mosaic.version = 11 : i64} {
  func.func @_gpt_kernel(%arg0: memref<16x32xf32, #tpu.memory_space<vmem>>, %arg1: memref<64x8xf32, #tpu.memory_space<vmem>>, %arg2: memref<128x32xbf16, #tpu.memory_space<vmem>>, %arg3: memref<192x128xbf16, #tpu.memory_space<vmem>>, %arg4: memref<9x128xf32, #tpu.memory_space<vmem>>, %arg5: memref<16x128xf32, #tpu.memory_space<vmem>>) attributes {dimension_semantics = [], scalar_prefetch = 0 : i64, scratch_operands = 0 : i64, tpu.core_type = #tpu.core_type<tc>} {
    %c0 = arith.constant 0 : index
    %c0_0 = arith.constant 0 : index
    %0 = vector.load %arg0[%c0, %c0_0] : memref<16x32xf32, #tpu.memory_space<vmem>>, vector<16x32xf32>
    %c0_1 = arith.constant 0 : index
    %c0_2 = arith.constant 0 : index
    %1 = vector.load %arg1[%c0_1, %c0_2] : memref<64x8xf32, #tpu.memory_space<vmem>>, vector<64x8xf32>
    %c0_3 = arith.constant 0 : index
    %c0_4 = arith.constant 0 : index
    %2 = vector.load %arg4[%c0_3, %c0_4] : memref<9x128xf32, #tpu.memory_space<vmem>>, vector<1x32xf32>
    %c0_5 = arith.constant 0 : index
    %c32 = arith.constant 32 : index
    %3 = vector.load %arg4[%c0_5, %c32] : memref<9x128xf32, #tpu.memory_space<vmem>>, vector<1x32xf32>
    %c0_6 = arith.constant 0 : index
    %c64 = arith.constant 64 : index
    %4 = vector.load %arg4[%c0_6, %c64] : memref<9x128xf32, #tpu.memory_space<vmem>>, vector<1x32xf32>
    %c0_7 = arith.constant 0 : index
    %c96 = arith.constant 96 : index
    %5 = vector.load %arg4[%c0_7, %c96] : memref<9x128xf32, #tpu.memory_space<vmem>>, vector<1x32xf32>
    %c1 = arith.constant 1 : index
    %c0_8 = arith.constant 0 : index
    %6 = vector.load %arg4[%c1, %c0_8] : memref<9x128xf32, #tpu.memory_space<vmem>>, vector<1x96xf32>
    %c1_9 = arith.constant 1 : index
    %c96_10 = arith.constant 96 : index
    %7 = vector.load %arg4[%c1_9, %c96_10] : memref<9x128xf32, #tpu.memory_space<vmem>>, vector<1x32xf32>
    %c2 = arith.constant 2 : index
    %c0_11 = arith.constant 0 : index
    %8 = vector.load %arg4[%c2, %c0_11] : memref<9x128xf32, #tpu.memory_space<vmem>>, vector<1x128xf32>
    %c3 = arith.constant 3 : index
    %c0_12 = arith.constant 0 : index
    %9 = vector.load %arg4[%c3, %c0_12] : memref<9x128xf32, #tpu.memory_space<vmem>>, vector<1x32xf32>
    %c0_13 = arith.constant 0 : index
    %c0_14 = arith.constant 0 : index
    %10 = vector.load %arg3[%c0_13, %c0_14] : memref<192x128xbf16, #tpu.memory_space<vmem>>, vector<32x96xbf16>
    %c0_15 = arith.constant 0 : index
    %c96_16 = arith.constant 96 : index
    %11 = vector.load %arg3[%c0_15, %c96_16] : memref<192x128xbf16, #tpu.memory_space<vmem>>, vector<32x32xbf16>
    %c32_17 = arith.constant 32 : index
    %c0_18 = arith.constant 0 : index
    %12 = vector.load %arg3[%c32_17, %c0_18] : memref<192x128xbf16, #tpu.memory_space<vmem>>, vector<32x128xbf16>
    %c64_19 = arith.constant 64 : index
    %c0_20 = arith.constant 0 : index
    %13 = vector.load %arg3[%c64_19, %c0_20] : memref<192x128xbf16, #tpu.memory_space<vmem>>, vector<32x128xbf16>
    %cst = arith.constant dense<0.000000e+00> : vector<16xf32>
    %14 = vector.multi_reduction <add>, %0, %cst [1] : vector<16x32xf32> to vector<16xf32>
    %15 = vector.shape_cast %14 : vector<16xf32> to vector<16x1xf32>
    %cst_21 = arith.constant 3.200000e+01 : f32
    %16 = vector.broadcast %cst_21 : f32 to vector<16x1xf32>
    %17 = arith.divf %15, %16 : vector<16x1xf32>
    %18 = vector.broadcast %17 : vector<16x1xf32> to vector<16x32xf32>
    %19 = arith.subf %0, %18 : vector<16x32xf32>
    %20 = arith.mulf %19, %19 : vector<16x32xf32>
    %cst_22 = arith.constant dense<0.000000e+00> : vector<16xf32>
    %21 = vector.multi_reduction <add>, %20, %cst_22 [1] : vector<16x32xf32> to vector<16xf32>
    %22 = vector.shape_cast %21 : vector<16xf32> to vector<16x1xf32>
    %cst_23 = arith.constant 3.200000e+01 : f32
    %23 = vector.broadcast %cst_23 : f32 to vector<16x1xf32>
    %24 = arith.divf %22, %23 : vector<16x1xf32>
    %25 = vector.broadcast %17 : vector<16x1xf32> to vector<16x32xf32>
    %26 = arith.subf %0, %25 : vector<16x32xf32>
    %cst_24 = arith.constant 9.99999974E-6 : f32
    %27 = vector.broadcast %cst_24 : f32 to vector<16x1xf32>
    %28 = arith.addf %24, %27 : vector<16x1xf32>
    %29 = math.rsqrt %28 : vector<16x1xf32>
    %30 = vector.broadcast %29 : vector<16x1xf32> to vector<16x32xf32>
    %31 = arith.mulf %26, %30 : vector<16x32xf32>
    %32 = vector.broadcast %2 : vector<1x32xf32> to vector<16x32xf32>
    %33 = arith.mulf %31, %32 : vector<16x32xf32>
    %34 = vector.broadcast %3 : vector<1x32xf32> to vector<16x32xf32>
    %35 = arith.addf %33, %34 : vector<16x32xf32>
    %36 = arith.truncf %35 : vector<16x32xf32> to vector<16x32xbf16>
    %cst_25 = arith.constant dense<0.000000e+00> : vector<16x96xf32>
    %37 = tpu.matmul %36, %10, %cst_25 {dimension_numbers = #tpu.dot_dimension_numbers<[1], [0], [0], [1], [0, 0, 1, 1], [], []>} : vector<16x32xbf16>, vector<32x96xbf16>, vector<16x96xf32> -> vector<16x96xf32>
    %38 = vector.broadcast %6 : vector<1x96xf32> to vector<16x96xf32>
    %39 = arith.addf %37, %38 : vector<16x96xf32>
    %40 = arith.truncf %39 : vector<16x96xf32> to vector<16x96xbf16>
    %41 = vector.extract_strided_slice %40 {offsets = [0, 0], sizes = [8, 8], strides = [1, 1]} : vector<16x96xbf16> to vector<8x8xbf16>
    %42 = vector.extract_strided_slice %40 {offsets = [0, 32], sizes = [8, 8], strides = [1, 1]} : vector<16x96xbf16> to vector<8x8xbf16>
    %cst_26 = arith.constant dense<0.000000e+00> : vector<8x8xf32>
    %43 = tpu.matmul %41, %42, %cst_26 {dimension_numbers = #tpu.dot_dimension_numbers<[1], [1], [0], [0], [0, 0, 1, 0], [], []>} : vector<8x8xbf16>, vector<8x8xbf16>, vector<8x8xf32> -> vector<8x8xf32>
    %44 = vector.extract_strided_slice %40 {offsets = [0, 8], sizes = [8, 8], strides = [1, 1]} : vector<16x96xbf16> to vector<8x8xbf16>
    %45 = vector.extract_strided_slice %40 {offsets = [0, 40], sizes = [8, 8], strides = [1, 1]} : vector<16x96xbf16> to vector<8x8xbf16>
    %cst_27 = arith.constant dense<0.000000e+00> : vector<8x8xf32>
    %46 = tpu.matmul %44, %45, %cst_27 {dimension_numbers = #tpu.dot_dimension_numbers<[1], [1], [0], [0], [0, 0, 1, 0], [], []>} : vector<8x8xbf16>, vector<8x8xbf16>, vector<8x8xf32> -> vector<8x8xf32>
    %47 = vector.extract_strided_slice %40 {offsets = [0, 16], sizes = [8, 8], strides = [1, 1]} : vector<16x96xbf16> to vector<8x8xbf16>
    %48 = vector.extract_strided_slice %40 {offsets = [0, 48], sizes = [8, 8], strides = [1, 1]} : vector<16x96xbf16> to vector<8x8xbf16>
    %cst_28 = arith.constant dense<0.000000e+00> : vector<8x8xf32>
    %49 = tpu.matmul %47, %48, %cst_28 {dimension_numbers = #tpu.dot_dimension_numbers<[1], [1], [0], [0], [0, 0, 1, 0], [], []>} : vector<8x8xbf16>, vector<8x8xbf16>, vector<8x8xf32> -> vector<8x8xf32>
    %50 = vector.extract_strided_slice %40 {offsets = [0, 24], sizes = [8, 8], strides = [1, 1]} : vector<16x96xbf16> to vector<8x8xbf16>
    %51 = vector.extract_strided_slice %40 {offsets = [0, 56], sizes = [8, 8], strides = [1, 1]} : vector<16x96xbf16> to vector<8x8xbf16>
    %cst_29 = arith.constant dense<0.000000e+00> : vector<8x8xf32>
    %52 = tpu.matmul %50, %51, %cst_29 {dimension_numbers = #tpu.dot_dimension_numbers<[1], [1], [0], [0], [0, 0, 1, 0], [], []>} : vector<8x8xbf16>, vector<8x8xbf16>, vector<8x8xf32> -> vector<8x8xf32>
    %53 = vector.extract_strided_slice %40 {offsets = [8, 0], sizes = [8, 8], strides = [1, 1]} : vector<16x96xbf16> to vector<8x8xbf16>
    %54 = vector.extract_strided_slice %40 {offsets = [8, 32], sizes = [8, 8], strides = [1, 1]} : vector<16x96xbf16> to vector<8x8xbf16>
    %cst_30 = arith.constant dense<0.000000e+00> : vector<8x8xf32>
    %55 = tpu.matmul %53, %54, %cst_30 {dimension_numbers = #tpu.dot_dimension_numbers<[1], [1], [0], [0], [0, 0, 1, 0], [], []>} : vector<8x8xbf16>, vector<8x8xbf16>, vector<8x8xf32> -> vector<8x8xf32>
    %56 = vector.extract_strided_slice %40 {offsets = [8, 8], sizes = [8, 8], strides = [1, 1]} : vector<16x96xbf16> to vector<8x8xbf16>
    %57 = vector.extract_strided_slice %40 {offsets = [8, 40], sizes = [8, 8], strides = [1, 1]} : vector<16x96xbf16> to vector<8x8xbf16>
    %cst_31 = arith.constant dense<0.000000e+00> : vector<8x8xf32>
    %58 = tpu.matmul %56, %57, %cst_31 {dimension_numbers = #tpu.dot_dimension_numbers<[1], [1], [0], [0], [0, 0, 1, 0], [], []>} : vector<8x8xbf16>, vector<8x8xbf16>, vector<8x8xf32> -> vector<8x8xf32>
    %59 = vector.extract_strided_slice %40 {offsets = [8, 16], sizes = [8, 8], strides = [1, 1]} : vector<16x96xbf16> to vector<8x8xbf16>
    %60 = vector.extract_strided_slice %40 {offsets = [8, 48], sizes = [8, 8], strides = [1, 1]} : vector<16x96xbf16> to vector<8x8xbf16>
    %cst_32 = arith.constant dense<0.000000e+00> : vector<8x8xf32>
    %61 = tpu.matmul %59, %60, %cst_32 {dimension_numbers = #tpu.dot_dimension_numbers<[1], [1], [0], [0], [0, 0, 1, 0], [], []>} : vector<8x8xbf16>, vector<8x8xbf16>, vector<8x8xf32> -> vector<8x8xf32>
    %62 = vector.extract_strided_slice %40 {offsets = [8, 24], sizes = [8, 8], strides = [1, 1]} : vector<16x96xbf16> to vector<8x8xbf16>
    %63 = vector.extract_strided_slice %40 {offsets = [8, 56], sizes = [8, 8], strides = [1, 1]} : vector<16x96xbf16> to vector<8x8xbf16>
    %cst_33 = arith.constant dense<0.000000e+00> : vector<8x8xf32>
    %64 = tpu.matmul %62, %63, %cst_33 {dimension_numbers = #tpu.dot_dimension_numbers<[1], [1], [0], [0], [0, 0, 1, 0], [], []>} : vector<8x8xbf16>, vector<8x8xbf16>, vector<8x8xf32> -> vector<8x8xf32>
    %65 = tpu.concatenate %43, %46, %49, %52, %55, %58, %61, %64 in 0 : vector<8x8xf32>, vector<8x8xf32>, vector<8x8xf32>, vector<8x8xf32>, vector<8x8xf32>, vector<8x8xf32>, vector<8x8xf32>, vector<8x8xf32> -> vector<64x8xf32>
    %cst_34 = arith.constant 0.353553385 : f32
    %66 = vector.broadcast %cst_34 : f32 to vector<64x8xf32>
    %67 = arith.mulf %65, %66 : vector<64x8xf32>
    %68 = arith.addf %67, %1 : vector<64x8xf32>
    %cst_35 = arith.constant dense<0xFF800000> : vector<64xf32>
    %69 = vector.multi_reduction <maximumf>, %68, %cst_35 [1] : vector<64x8xf32> to vector<64xf32>
    %70 = vector.shape_cast %69 : vector<64xf32> to vector<64x1xf32>
    %71 = vector.broadcast %70 : vector<64x1xf32> to vector<64x8xf32>
    %72 = arith.subf %68, %71 : vector<64x8xf32>
    %73 = math.exp %72 : vector<64x8xf32>
    %cst_36 = arith.constant dense<0.000000e+00> : vector<64xf32>
    %74 = vector.multi_reduction <add>, %73, %cst_36 [1] : vector<64x8xf32> to vector<64xf32>
    %75 = vector.shape_cast %74 : vector<64xf32> to vector<64x1xf32>
    %76 = tpu.reciprocal %75 : vector<64x1xf32> -> vector<64x1xf32>
    %77 = vector.broadcast %76 : vector<64x1xf32> to vector<64x8xf32>
    %78 = arith.mulf %73, %77 : vector<64x8xf32>
    %79 = arith.truncf %78 : vector<64x8xf32> to vector<64x8xbf16>
    %80 = vector.extract_strided_slice %40 {offsets = [0, 64], sizes = [8, 8], strides = [1, 1]} : vector<16x96xbf16> to vector<8x8xbf16>
    %81 = vector.extract_strided_slice %79 {offsets = [0, 0], sizes = [8, 8], strides = [1, 1]} : vector<64x8xbf16> to vector<8x8xbf16>
    %cst_37 = arith.constant dense<0.000000e+00> : vector<8x8xf32>
    %82 = tpu.matmul %81, %80, %cst_37 {dimension_numbers = #tpu.dot_dimension_numbers<[1], [0], [0], [1], [0, 0, 1, 1], [], []>} : vector<8x8xbf16>, vector<8x8xbf16>, vector<8x8xf32> -> vector<8x8xf32>
    %83 = vector.extract_strided_slice %40 {offsets = [0, 72], sizes = [8, 8], strides = [1, 1]} : vector<16x96xbf16> to vector<8x8xbf16>
    %84 = vector.extract_strided_slice %79 {offsets = [8, 0], sizes = [8, 8], strides = [1, 1]} : vector<64x8xbf16> to vector<8x8xbf16>
    %cst_38 = arith.constant dense<0.000000e+00> : vector<8x8xf32>
    %85 = tpu.matmul %84, %83, %cst_38 {dimension_numbers = #tpu.dot_dimension_numbers<[1], [0], [0], [1], [0, 0, 1, 1], [], []>} : vector<8x8xbf16>, vector<8x8xbf16>, vector<8x8xf32> -> vector<8x8xf32>
    %86 = vector.extract_strided_slice %40 {offsets = [0, 80], sizes = [8, 8], strides = [1, 1]} : vector<16x96xbf16> to vector<8x8xbf16>
    %87 = vector.extract_strided_slice %79 {offsets = [16, 0], sizes = [8, 8], strides = [1, 1]} : vector<64x8xbf16> to vector<8x8xbf16>
    %cst_39 = arith.constant dense<0.000000e+00> : vector<8x8xf32>
    %88 = tpu.matmul %87, %86, %cst_39 {dimension_numbers = #tpu.dot_dimension_numbers<[1], [0], [0], [1], [0, 0, 1, 1], [], []>} : vector<8x8xbf16>, vector<8x8xbf16>, vector<8x8xf32> -> vector<8x8xf32>
    %89 = vector.extract_strided_slice %40 {offsets = [0, 88], sizes = [8, 8], strides = [1, 1]} : vector<16x96xbf16> to vector<8x8xbf16>
    %90 = vector.extract_strided_slice %79 {offsets = [24, 0], sizes = [8, 8], strides = [1, 1]} : vector<64x8xbf16> to vector<8x8xbf16>
    %cst_40 = arith.constant dense<0.000000e+00> : vector<8x8xf32>
    %91 = tpu.matmul %90, %89, %cst_40 {dimension_numbers = #tpu.dot_dimension_numbers<[1], [0], [0], [1], [0, 0, 1, 1], [], []>} : vector<8x8xbf16>, vector<8x8xbf16>, vector<8x8xf32> -> vector<8x8xf32>
    %92 = tpu.concatenate %82, %85, %88, %91 in 1 : vector<8x8xf32>, vector<8x8xf32>, vector<8x8xf32>, vector<8x8xf32> -> vector<8x32xf32>
    %93 = vector.extract_strided_slice %40 {offsets = [8, 64], sizes = [8, 8], strides = [1, 1]} : vector<16x96xbf16> to vector<8x8xbf16>
    %94 = vector.extract_strided_slice %79 {offsets = [32, 0], sizes = [8, 8], strides = [1, 1]} : vector<64x8xbf16> to vector<8x8xbf16>
    %cst_41 = arith.constant dense<0.000000e+00> : vector<8x8xf32>
    %95 = tpu.matmul %94, %93, %cst_41 {dimension_numbers = #tpu.dot_dimension_numbers<[1], [0], [0], [1], [0, 0, 1, 1], [], []>} : vector<8x8xbf16>, vector<8x8xbf16>, vector<8x8xf32> -> vector<8x8xf32>
    %96 = vector.extract_strided_slice %40 {offsets = [8, 72], sizes = [8, 8], strides = [1, 1]} : vector<16x96xbf16> to vector<8x8xbf16>
    %97 = vector.extract_strided_slice %79 {offsets = [40, 0], sizes = [8, 8], strides = [1, 1]} : vector<64x8xbf16> to vector<8x8xbf16>
    %cst_42 = arith.constant dense<0.000000e+00> : vector<8x8xf32>
    %98 = tpu.matmul %97, %96, %cst_42 {dimension_numbers = #tpu.dot_dimension_numbers<[1], [0], [0], [1], [0, 0, 1, 1], [], []>} : vector<8x8xbf16>, vector<8x8xbf16>, vector<8x8xf32> -> vector<8x8xf32>
    %99 = vector.extract_strided_slice %40 {offsets = [8, 80], sizes = [8, 8], strides = [1, 1]} : vector<16x96xbf16> to vector<8x8xbf16>
    %100 = vector.extract_strided_slice %79 {offsets = [48, 0], sizes = [8, 8], strides = [1, 1]} : vector<64x8xbf16> to vector<8x8xbf16>
    %cst_43 = arith.constant dense<0.000000e+00> : vector<8x8xf32>
    %101 = tpu.matmul %100, %99, %cst_43 {dimension_numbers = #tpu.dot_dimension_numbers<[1], [0], [0], [1], [0, 0, 1, 1], [], []>} : vector<8x8xbf16>, vector<8x8xbf16>, vector<8x8xf32> -> vector<8x8xf32>
    %102 = vector.extract_strided_slice %40 {offsets = [8, 88], sizes = [8, 8], strides = [1, 1]} : vector<16x96xbf16> to vector<8x8xbf16>
    %103 = vector.extract_strided_slice %79 {offsets = [56, 0], sizes = [8, 8], strides = [1, 1]} : vector<64x8xbf16> to vector<8x8xbf16>
    %cst_44 = arith.constant dense<0.000000e+00> : vector<8x8xf32>
    %104 = tpu.matmul %103, %102, %cst_44 {dimension_numbers = #tpu.dot_dimension_numbers<[1], [0], [0], [1], [0, 0, 1, 1], [], []>} : vector<8x8xbf16>, vector<8x8xbf16>, vector<8x8xf32> -> vector<8x8xf32>
    %105 = tpu.concatenate %95, %98, %101, %104 in 1 : vector<8x8xf32>, vector<8x8xf32>, vector<8x8xf32>, vector<8x8xf32> -> vector<8x32xf32>
    %106 = tpu.concatenate %92, %105 in 0 : vector<8x32xf32>, vector<8x32xf32> -> vector<16x32xf32>
    %107 = arith.truncf %106 : vector<16x32xf32> to vector<16x32xbf16>
    %cst_45 = arith.constant dense<0.000000e+00> : vector<16x32xf32>
    %108 = tpu.matmul %107, %11, %cst_45 {dimension_numbers = #tpu.dot_dimension_numbers<[1], [0], [0], [1], [0, 0, 1, 1], [], []>} : vector<16x32xbf16>, vector<32x32xbf16>, vector<16x32xf32> -> vector<16x32xf32>
    %109 = vector.broadcast %7 : vector<1x32xf32> to vector<16x32xf32>
    %110 = arith.addf %108, %109 : vector<16x32xf32>
    %111 = arith.addf %0, %110 : vector<16x32xf32>
    %cst_46 = arith.constant dense<0.000000e+00> : vector<16xf32>
    %112 = vector.multi_reduction <add>, %111, %cst_46 [1] : vector<16x32xf32> to vector<16xf32>
    %113 = vector.shape_cast %112 : vector<16xf32> to vector<16x1xf32>
    %cst_47 = arith.constant 3.200000e+01 : f32
    %114 = vector.broadcast %cst_47 : f32 to vector<16x1xf32>
    %115 = arith.divf %113, %114 : vector<16x1xf32>
    %116 = vector.broadcast %115 : vector<16x1xf32> to vector<16x32xf32>
    %117 = arith.subf %111, %116 : vector<16x32xf32>
    %118 = arith.mulf %117, %117 : vector<16x32xf32>
    %cst_48 = arith.constant dense<0.000000e+00> : vector<16xf32>
    %119 = vector.multi_reduction <add>, %118, %cst_48 [1] : vector<16x32xf32> to vector<16xf32>
    %120 = vector.shape_cast %119 : vector<16xf32> to vector<16x1xf32>
    %cst_49 = arith.constant 3.200000e+01 : f32
    %121 = vector.broadcast %cst_49 : f32 to vector<16x1xf32>
    %122 = arith.divf %120, %121 : vector<16x1xf32>
    %123 = vector.broadcast %115 : vector<16x1xf32> to vector<16x32xf32>
    %124 = arith.subf %111, %123 : vector<16x32xf32>
    %cst_50 = arith.constant 9.99999974E-6 : f32
    %125 = vector.broadcast %cst_50 : f32 to vector<16x1xf32>
    %126 = arith.addf %122, %125 : vector<16x1xf32>
    %127 = math.rsqrt %126 : vector<16x1xf32>
    %128 = vector.broadcast %127 : vector<16x1xf32> to vector<16x32xf32>
    %129 = arith.mulf %124, %128 : vector<16x32xf32>
    %130 = vector.broadcast %4 : vector<1x32xf32> to vector<16x32xf32>
    %131 = arith.mulf %129, %130 : vector<16x32xf32>
    %132 = vector.broadcast %5 : vector<1x32xf32> to vector<16x32xf32>
    %133 = arith.addf %131, %132 : vector<16x32xf32>
    %134 = arith.truncf %133 : vector<16x32xf32> to vector<16x32xbf16>
    %cst_51 = arith.constant dense<0.000000e+00> : vector<16x128xf32>
    %135 = tpu.matmul %134, %12, %cst_51 {dimension_numbers = #tpu.dot_dimension_numbers<[1], [0], [0], [1], [0, 0, 1, 1], [], []>} : vector<16x32xbf16>, vector<32x128xbf16>, vector<16x128xf32> -> vector<16x128xf32>
    %136 = vector.broadcast %8 : vector<1x128xf32> to vector<16x128xf32>
    %137 = arith.addf %135, %136 : vector<16x128xf32>
    %cst_52 = arith.constant 5.000000e-01 : f32
    %138 = vector.broadcast %cst_52 : f32 to vector<16x128xf32>
    %139 = arith.mulf %138, %137 : vector<16x128xf32>
    %140 = arith.mulf %137, %137 : vector<16x128xf32>
    %141 = arith.mulf %137, %140 : vector<16x128xf32>
    %cst_53 = arith.constant 4.471500e-02 : f32
    %142 = vector.broadcast %cst_53 : f32 to vector<16x128xf32>
    %143 = arith.mulf %142, %141 : vector<16x128xf32>
    %144 = arith.addf %137, %143 : vector<16x128xf32>
    %cst_54 = arith.constant 0.797884583 : f32
    %145 = vector.broadcast %cst_54 : f32 to vector<16x128xf32>
    %146 = arith.mulf %145, %144 : vector<16x128xf32>
    %147 = math.tanh %146 : vector<16x128xf32>
    %cst_55 = arith.constant 1.000000e+00 : f32
    %148 = vector.broadcast %cst_55 : f32 to vector<16x128xf32>
    %149 = arith.addf %148, %147 : vector<16x128xf32>
    %150 = arith.mulf %139, %149 : vector<16x128xf32>
    %151 = arith.truncf %150 : vector<16x128xf32> to vector<16x128xbf16>
    %cst_56 = arith.constant dense<0.000000e+00> : vector<16x32xf32>
    %152 = tpu.matmul %151, %13, %cst_56 {dimension_numbers = #tpu.dot_dimension_numbers<[1], [1], [0], [0], [0, 0, 1, 0], [], []>} : vector<16x128xbf16>, vector<32x128xbf16>, vector<16x32xf32> -> vector<16x32xf32>
    %153 = vector.broadcast %9 : vector<1x32xf32> to vector<16x32xf32>
    %154 = arith.addf %152, %153 : vector<16x32xf32>
    %155 = arith.addf %111, %154 : vector<16x32xf32>
    %c4 = arith.constant 4 : index
    %c0_57 = arith.constant 0 : index
    %156 = vector.load %arg4[%c4, %c0_57] : memref<9x128xf32, #tpu.memory_space<vmem>>, vector<1x32xf32>
    %c4_58 = arith.constant 4 : index
    %c32_59 = arith.constant 32 : index
    %157 = vector.load %arg4[%c4_58, %c32_59] : memref<9x128xf32, #tpu.memory_space<vmem>>, vector<1x32xf32>
    %c4_60 = arith.constant 4 : index
    %c64_61 = arith.constant 64 : index
    %158 = vector.load %arg4[%c4_60, %c64_61] : memref<9x128xf32, #tpu.memory_space<vmem>>, vector<1x32xf32>
    %c4_62 = arith.constant 4 : index
    %c96_63 = arith.constant 96 : index
    %159 = vector.load %arg4[%c4_62, %c96_63] : memref<9x128xf32, #tpu.memory_space<vmem>>, vector<1x32xf32>
    %c5 = arith.constant 5 : index
    %c0_64 = arith.constant 0 : index
    %160 = vector.load %arg4[%c5, %c0_64] : memref<9x128xf32, #tpu.memory_space<vmem>>, vector<1x96xf32>
    %c5_65 = arith.constant 5 : index
    %c96_66 = arith.constant 96 : index
    %161 = vector.load %arg4[%c5_65, %c96_66] : memref<9x128xf32, #tpu.memory_space<vmem>>, vector<1x32xf32>
    %c6 = arith.constant 6 : index
    %c0_67 = arith.constant 0 : index
    %162 = vector.load %arg4[%c6, %c0_67] : memref<9x128xf32, #tpu.memory_space<vmem>>, vector<1x128xf32>
    %c7 = arith.constant 7 : index
    %c0_68 = arith.constant 0 : index
    %163 = vector.load %arg4[%c7, %c0_68] : memref<9x128xf32, #tpu.memory_space<vmem>>, vector<1x32xf32>
    %c96_69 = arith.constant 96 : index
    %c0_70 = arith.constant 0 : index
    %164 = vector.load %arg3[%c96_69, %c0_70] : memref<192x128xbf16, #tpu.memory_space<vmem>>, vector<32x96xbf16>
    %c96_71 = arith.constant 96 : index
    %c96_72 = arith.constant 96 : index
    %165 = vector.load %arg3[%c96_71, %c96_72] : memref<192x128xbf16, #tpu.memory_space<vmem>>, vector<32x32xbf16>
    %c128 = arith.constant 128 : index
    %c0_73 = arith.constant 0 : index
    %166 = vector.load %arg3[%c128, %c0_73] : memref<192x128xbf16, #tpu.memory_space<vmem>>, vector<32x128xbf16>
    %c160 = arith.constant 160 : index
    %c0_74 = arith.constant 0 : index
    %167 = vector.load %arg3[%c160, %c0_74] : memref<192x128xbf16, #tpu.memory_space<vmem>>, vector<32x128xbf16>
    %cst_75 = arith.constant dense<0.000000e+00> : vector<16xf32>
    %168 = vector.multi_reduction <add>, %155, %cst_75 [1] : vector<16x32xf32> to vector<16xf32>
    %169 = vector.shape_cast %168 : vector<16xf32> to vector<16x1xf32>
    %cst_76 = arith.constant 3.200000e+01 : f32
    %170 = vector.broadcast %cst_76 : f32 to vector<16x1xf32>
    %171 = arith.divf %169, %170 : vector<16x1xf32>
    %172 = vector.broadcast %171 : vector<16x1xf32> to vector<16x32xf32>
    %173 = arith.subf %155, %172 : vector<16x32xf32>
    %174 = arith.mulf %173, %173 : vector<16x32xf32>
    %cst_77 = arith.constant dense<0.000000e+00> : vector<16xf32>
    %175 = vector.multi_reduction <add>, %174, %cst_77 [1] : vector<16x32xf32> to vector<16xf32>
    %176 = vector.shape_cast %175 : vector<16xf32> to vector<16x1xf32>
    %cst_78 = arith.constant 3.200000e+01 : f32
    %177 = vector.broadcast %cst_78 : f32 to vector<16x1xf32>
    %178 = arith.divf %176, %177 : vector<16x1xf32>
    %179 = vector.broadcast %171 : vector<16x1xf32> to vector<16x32xf32>
    %180 = arith.subf %155, %179 : vector<16x32xf32>
    %cst_79 = arith.constant 9.99999974E-6 : f32
    %181 = vector.broadcast %cst_79 : f32 to vector<16x1xf32>
    %182 = arith.addf %178, %181 : vector<16x1xf32>
    %183 = math.rsqrt %182 : vector<16x1xf32>
    %184 = vector.broadcast %183 : vector<16x1xf32> to vector<16x32xf32>
    %185 = arith.mulf %180, %184 : vector<16x32xf32>
    %186 = vector.broadcast %156 : vector<1x32xf32> to vector<16x32xf32>
    %187 = arith.mulf %185, %186 : vector<16x32xf32>
    %188 = vector.broadcast %157 : vector<1x32xf32> to vector<16x32xf32>
    %189 = arith.addf %187, %188 : vector<16x32xf32>
    %190 = arith.truncf %189 : vector<16x32xf32> to vector<16x32xbf16>
    %cst_80 = arith.constant dense<0.000000e+00> : vector<16x96xf32>
    %191 = tpu.matmul %190, %164, %cst_80 {dimension_numbers = #tpu.dot_dimension_numbers<[1], [0], [0], [1], [0, 0, 1, 1], [], []>} : vector<16x32xbf16>, vector<32x96xbf16>, vector<16x96xf32> -> vector<16x96xf32>
    %192 = vector.broadcast %160 : vector<1x96xf32> to vector<16x96xf32>
    %193 = arith.addf %191, %192 : vector<16x96xf32>
    %194 = arith.truncf %193 : vector<16x96xf32> to vector<16x96xbf16>
    %195 = vector.extract_strided_slice %194 {offsets = [0, 0], sizes = [8, 8], strides = [1, 1]} : vector<16x96xbf16> to vector<8x8xbf16>
    %196 = vector.extract_strided_slice %194 {offsets = [0, 32], sizes = [8, 8], strides = [1, 1]} : vector<16x96xbf16> to vector<8x8xbf16>
    %cst_81 = arith.constant dense<0.000000e+00> : vector<8x8xf32>
    %197 = tpu.matmul %195, %196, %cst_81 {dimension_numbers = #tpu.dot_dimension_numbers<[1], [1], [0], [0], [0, 0, 1, 0], [], []>} : vector<8x8xbf16>, vector<8x8xbf16>, vector<8x8xf32> -> vector<8x8xf32>
    %198 = vector.extract_strided_slice %194 {offsets = [0, 8], sizes = [8, 8], strides = [1, 1]} : vector<16x96xbf16> to vector<8x8xbf16>
    %199 = vector.extract_strided_slice %194 {offsets = [0, 40], sizes = [8, 8], strides = [1, 1]} : vector<16x96xbf16> to vector<8x8xbf16>
    %cst_82 = arith.constant dense<0.000000e+00> : vector<8x8xf32>
    %200 = tpu.matmul %198, %199, %cst_82 {dimension_numbers = #tpu.dot_dimension_numbers<[1], [1], [0], [0], [0, 0, 1, 0], [], []>} : vector<8x8xbf16>, vector<8x8xbf16>, vector<8x8xf32> -> vector<8x8xf32>
    %201 = vector.extract_strided_slice %194 {offsets = [0, 16], sizes = [8, 8], strides = [1, 1]} : vector<16x96xbf16> to vector<8x8xbf16>
    %202 = vector.extract_strided_slice %194 {offsets = [0, 48], sizes = [8, 8], strides = [1, 1]} : vector<16x96xbf16> to vector<8x8xbf16>
    %cst_83 = arith.constant dense<0.000000e+00> : vector<8x8xf32>
    %203 = tpu.matmul %201, %202, %cst_83 {dimension_numbers = #tpu.dot_dimension_numbers<[1], [1], [0], [0], [0, 0, 1, 0], [], []>} : vector<8x8xbf16>, vector<8x8xbf16>, vector<8x8xf32> -> vector<8x8xf32>
    %204 = vector.extract_strided_slice %194 {offsets = [0, 24], sizes = [8, 8], strides = [1, 1]} : vector<16x96xbf16> to vector<8x8xbf16>
    %205 = vector.extract_strided_slice %194 {offsets = [0, 56], sizes = [8, 8], strides = [1, 1]} : vector<16x96xbf16> to vector<8x8xbf16>
    %cst_84 = arith.constant dense<0.000000e+00> : vector<8x8xf32>
    %206 = tpu.matmul %204, %205, %cst_84 {dimension_numbers = #tpu.dot_dimension_numbers<[1], [1], [0], [0], [0, 0, 1, 0], [], []>} : vector<8x8xbf16>, vector<8x8xbf16>, vector<8x8xf32> -> vector<8x8xf32>
    %207 = vector.extract_strided_slice %194 {offsets = [8, 0], sizes = [8, 8], strides = [1, 1]} : vector<16x96xbf16> to vector<8x8xbf16>
    %208 = vector.extract_strided_slice %194 {offsets = [8, 32], sizes = [8, 8], strides = [1, 1]} : vector<16x96xbf16> to vector<8x8xbf16>
    %cst_85 = arith.constant dense<0.000000e+00> : vector<8x8xf32>
    %209 = tpu.matmul %207, %208, %cst_85 {dimension_numbers = #tpu.dot_dimension_numbers<[1], [1], [0], [0], [0, 0, 1, 0], [], []>} : vector<8x8xbf16>, vector<8x8xbf16>, vector<8x8xf32> -> vector<8x8xf32>
    %210 = vector.extract_strided_slice %194 {offsets = [8, 8], sizes = [8, 8], strides = [1, 1]} : vector<16x96xbf16> to vector<8x8xbf16>
    %211 = vector.extract_strided_slice %194 {offsets = [8, 40], sizes = [8, 8], strides = [1, 1]} : vector<16x96xbf16> to vector<8x8xbf16>
    %cst_86 = arith.constant dense<0.000000e+00> : vector<8x8xf32>
    %212 = tpu.matmul %210, %211, %cst_86 {dimension_numbers = #tpu.dot_dimension_numbers<[1], [1], [0], [0], [0, 0, 1, 0], [], []>} : vector<8x8xbf16>, vector<8x8xbf16>, vector<8x8xf32> -> vector<8x8xf32>
    %213 = vector.extract_strided_slice %194 {offsets = [8, 16], sizes = [8, 8], strides = [1, 1]} : vector<16x96xbf16> to vector<8x8xbf16>
    %214 = vector.extract_strided_slice %194 {offsets = [8, 48], sizes = [8, 8], strides = [1, 1]} : vector<16x96xbf16> to vector<8x8xbf16>
    %cst_87 = arith.constant dense<0.000000e+00> : vector<8x8xf32>
    %215 = tpu.matmul %213, %214, %cst_87 {dimension_numbers = #tpu.dot_dimension_numbers<[1], [1], [0], [0], [0, 0, 1, 0], [], []>} : vector<8x8xbf16>, vector<8x8xbf16>, vector<8x8xf32> -> vector<8x8xf32>
    %216 = vector.extract_strided_slice %194 {offsets = [8, 24], sizes = [8, 8], strides = [1, 1]} : vector<16x96xbf16> to vector<8x8xbf16>
    %217 = vector.extract_strided_slice %194 {offsets = [8, 56], sizes = [8, 8], strides = [1, 1]} : vector<16x96xbf16> to vector<8x8xbf16>
    %cst_88 = arith.constant dense<0.000000e+00> : vector<8x8xf32>
    %218 = tpu.matmul %216, %217, %cst_88 {dimension_numbers = #tpu.dot_dimension_numbers<[1], [1], [0], [0], [0, 0, 1, 0], [], []>} : vector<8x8xbf16>, vector<8x8xbf16>, vector<8x8xf32> -> vector<8x8xf32>
    %219 = tpu.concatenate %197, %200, %203, %206, %209, %212, %215, %218 in 0 : vector<8x8xf32>, vector<8x8xf32>, vector<8x8xf32>, vector<8x8xf32>, vector<8x8xf32>, vector<8x8xf32>, vector<8x8xf32>, vector<8x8xf32> -> vector<64x8xf32>
    %cst_89 = arith.constant 0.353553385 : f32
    %220 = vector.broadcast %cst_89 : f32 to vector<64x8xf32>
    %221 = arith.mulf %219, %220 : vector<64x8xf32>
    %222 = arith.addf %221, %1 : vector<64x8xf32>
    %cst_90 = arith.constant dense<0xFF800000> : vector<64xf32>
    %223 = vector.multi_reduction <maximumf>, %222, %cst_90 [1] : vector<64x8xf32> to vector<64xf32>
    %224 = vector.shape_cast %223 : vector<64xf32> to vector<64x1xf32>
    %225 = vector.broadcast %224 : vector<64x1xf32> to vector<64x8xf32>
    %226 = arith.subf %222, %225 : vector<64x8xf32>
    %227 = math.exp %226 : vector<64x8xf32>
    %cst_91 = arith.constant dense<0.000000e+00> : vector<64xf32>
    %228 = vector.multi_reduction <add>, %227, %cst_91 [1] : vector<64x8xf32> to vector<64xf32>
    %229 = vector.shape_cast %228 : vector<64xf32> to vector<64x1xf32>
    %230 = tpu.reciprocal %229 : vector<64x1xf32> -> vector<64x1xf32>
    %231 = vector.broadcast %230 : vector<64x1xf32> to vector<64x8xf32>
    %232 = arith.mulf %227, %231 : vector<64x8xf32>
    %233 = arith.truncf %232 : vector<64x8xf32> to vector<64x8xbf16>
    %234 = vector.extract_strided_slice %194 {offsets = [0, 64], sizes = [8, 8], strides = [1, 1]} : vector<16x96xbf16> to vector<8x8xbf16>
    %235 = vector.extract_strided_slice %233 {offsets = [0, 0], sizes = [8, 8], strides = [1, 1]} : vector<64x8xbf16> to vector<8x8xbf16>
    %cst_92 = arith.constant dense<0.000000e+00> : vector<8x8xf32>
    %236 = tpu.matmul %235, %234, %cst_92 {dimension_numbers = #tpu.dot_dimension_numbers<[1], [0], [0], [1], [0, 0, 1, 1], [], []>} : vector<8x8xbf16>, vector<8x8xbf16>, vector<8x8xf32> -> vector<8x8xf32>
    %237 = vector.extract_strided_slice %194 {offsets = [0, 72], sizes = [8, 8], strides = [1, 1]} : vector<16x96xbf16> to vector<8x8xbf16>
    %238 = vector.extract_strided_slice %233 {offsets = [8, 0], sizes = [8, 8], strides = [1, 1]} : vector<64x8xbf16> to vector<8x8xbf16>
    %cst_93 = arith.constant dense<0.000000e+00> : vector<8x8xf32>
    %239 = tpu.matmul %238, %237, %cst_93 {dimension_numbers = #tpu.dot_dimension_numbers<[1], [0], [0], [1], [0, 0, 1, 1], [], []>} : vector<8x8xbf16>, vector<8x8xbf16>, vector<8x8xf32> -> vector<8x8xf32>
    %240 = vector.extract_strided_slice %194 {offsets = [0, 80], sizes = [8, 8], strides = [1, 1]} : vector<16x96xbf16> to vector<8x8xbf16>
    %241 = vector.extract_strided_slice %233 {offsets = [16, 0], sizes = [8, 8], strides = [1, 1]} : vector<64x8xbf16> to vector<8x8xbf16>
    %cst_94 = arith.constant dense<0.000000e+00> : vector<8x8xf32>
    %242 = tpu.matmul %241, %240, %cst_94 {dimension_numbers = #tpu.dot_dimension_numbers<[1], [0], [0], [1], [0, 0, 1, 1], [], []>} : vector<8x8xbf16>, vector<8x8xbf16>, vector<8x8xf32> -> vector<8x8xf32>
    %243 = vector.extract_strided_slice %194 {offsets = [0, 88], sizes = [8, 8], strides = [1, 1]} : vector<16x96xbf16> to vector<8x8xbf16>
    %244 = vector.extract_strided_slice %233 {offsets = [24, 0], sizes = [8, 8], strides = [1, 1]} : vector<64x8xbf16> to vector<8x8xbf16>
    %cst_95 = arith.constant dense<0.000000e+00> : vector<8x8xf32>
    %245 = tpu.matmul %244, %243, %cst_95 {dimension_numbers = #tpu.dot_dimension_numbers<[1], [0], [0], [1], [0, 0, 1, 1], [], []>} : vector<8x8xbf16>, vector<8x8xbf16>, vector<8x8xf32> -> vector<8x8xf32>
    %246 = tpu.concatenate %236, %239, %242, %245 in 1 : vector<8x8xf32>, vector<8x8xf32>, vector<8x8xf32>, vector<8x8xf32> -> vector<8x32xf32>
    %247 = vector.extract_strided_slice %194 {offsets = [8, 64], sizes = [8, 8], strides = [1, 1]} : vector<16x96xbf16> to vector<8x8xbf16>
    %248 = vector.extract_strided_slice %233 {offsets = [32, 0], sizes = [8, 8], strides = [1, 1]} : vector<64x8xbf16> to vector<8x8xbf16>
    %cst_96 = arith.constant dense<0.000000e+00> : vector<8x8xf32>
    %249 = tpu.matmul %248, %247, %cst_96 {dimension_numbers = #tpu.dot_dimension_numbers<[1], [0], [0], [1], [0, 0, 1, 1], [], []>} : vector<8x8xbf16>, vector<8x8xbf16>, vector<8x8xf32> -> vector<8x8xf32>
    %250 = vector.extract_strided_slice %194 {offsets = [8, 72], sizes = [8, 8], strides = [1, 1]} : vector<16x96xbf16> to vector<8x8xbf16>
    %251 = vector.extract_strided_slice %233 {offsets = [40, 0], sizes = [8, 8], strides = [1, 1]} : vector<64x8xbf16> to vector<8x8xbf16>
    %cst_97 = arith.constant dense<0.000000e+00> : vector<8x8xf32>
    %252 = tpu.matmul %251, %250, %cst_97 {dimension_numbers = #tpu.dot_dimension_numbers<[1], [0], [0], [1], [0, 0, 1, 1], [], []>} : vector<8x8xbf16>, vector<8x8xbf16>, vector<8x8xf32> -> vector<8x8xf32>
    %253 = vector.extract_strided_slice %194 {offsets = [8, 80], sizes = [8, 8], strides = [1, 1]} : vector<16x96xbf16> to vector<8x8xbf16>
    %254 = vector.extract_strided_slice %233 {offsets = [48, 0], sizes = [8, 8], strides = [1, 1]} : vector<64x8xbf16> to vector<8x8xbf16>
    %cst_98 = arith.constant dense<0.000000e+00> : vector<8x8xf32>
    %255 = tpu.matmul %254, %253, %cst_98 {dimension_numbers = #tpu.dot_dimension_numbers<[1], [0], [0], [1], [0, 0, 1, 1], [], []>} : vector<8x8xbf16>, vector<8x8xbf16>, vector<8x8xf32> -> vector<8x8xf32>
    %256 = vector.extract_strided_slice %194 {offsets = [8, 88], sizes = [8, 8], strides = [1, 1]} : vector<16x96xbf16> to vector<8x8xbf16>
    %257 = vector.extract_strided_slice %233 {offsets = [56, 0], sizes = [8, 8], strides = [1, 1]} : vector<64x8xbf16> to vector<8x8xbf16>
    %cst_99 = arith.constant dense<0.000000e+00> : vector<8x8xf32>
    %258 = tpu.matmul %257, %256, %cst_99 {dimension_numbers = #tpu.dot_dimension_numbers<[1], [0], [0], [1], [0, 0, 1, 1], [], []>} : vector<8x8xbf16>, vector<8x8xbf16>, vector<8x8xf32> -> vector<8x8xf32>
    %259 = tpu.concatenate %249, %252, %255, %258 in 1 : vector<8x8xf32>, vector<8x8xf32>, vector<8x8xf32>, vector<8x8xf32> -> vector<8x32xf32>
    %260 = tpu.concatenate %246, %259 in 0 : vector<8x32xf32>, vector<8x32xf32> -> vector<16x32xf32>
    %261 = arith.truncf %260 : vector<16x32xf32> to vector<16x32xbf16>
    %cst_100 = arith.constant dense<0.000000e+00> : vector<16x32xf32>
    %262 = tpu.matmul %261, %165, %cst_100 {dimension_numbers = #tpu.dot_dimension_numbers<[1], [0], [0], [1], [0, 0, 1, 1], [], []>} : vector<16x32xbf16>, vector<32x32xbf16>, vector<16x32xf32> -> vector<16x32xf32>
    %263 = vector.broadcast %161 : vector<1x32xf32> to vector<16x32xf32>
    %264 = arith.addf %262, %263 : vector<16x32xf32>
    %265 = arith.addf %155, %264 : vector<16x32xf32>
    %cst_101 = arith.constant dense<0.000000e+00> : vector<16xf32>
    %266 = vector.multi_reduction <add>, %265, %cst_101 [1] : vector<16x32xf32> to vector<16xf32>
    %267 = vector.shape_cast %266 : vector<16xf32> to vector<16x1xf32>
    %cst_102 = arith.constant 3.200000e+01 : f32
    %268 = vector.broadcast %cst_102 : f32 to vector<16x1xf32>
    %269 = arith.divf %267, %268 : vector<16x1xf32>
    %270 = vector.broadcast %269 : vector<16x1xf32> to vector<16x32xf32>
    %271 = arith.subf %265, %270 : vector<16x32xf32>
    %272 = arith.mulf %271, %271 : vector<16x32xf32>
    %cst_103 = arith.constant dense<0.000000e+00> : vector<16xf32>
    %273 = vector.multi_reduction <add>, %272, %cst_103 [1] : vector<16x32xf32> to vector<16xf32>
    %274 = vector.shape_cast %273 : vector<16xf32> to vector<16x1xf32>
    %cst_104 = arith.constant 3.200000e+01 : f32
    %275 = vector.broadcast %cst_104 : f32 to vector<16x1xf32>
    %276 = arith.divf %274, %275 : vector<16x1xf32>
    %277 = vector.broadcast %269 : vector<16x1xf32> to vector<16x32xf32>
    %278 = arith.subf %265, %277 : vector<16x32xf32>
    %cst_105 = arith.constant 9.99999974E-6 : f32
    %279 = vector.broadcast %cst_105 : f32 to vector<16x1xf32>
    %280 = arith.addf %276, %279 : vector<16x1xf32>
    %281 = math.rsqrt %280 : vector<16x1xf32>
    %282 = vector.broadcast %281 : vector<16x1xf32> to vector<16x32xf32>
    %283 = arith.mulf %278, %282 : vector<16x32xf32>
    %284 = vector.broadcast %158 : vector<1x32xf32> to vector<16x32xf32>
    %285 = arith.mulf %283, %284 : vector<16x32xf32>
    %286 = vector.broadcast %159 : vector<1x32xf32> to vector<16x32xf32>
    %287 = arith.addf %285, %286 : vector<16x32xf32>
    %288 = arith.truncf %287 : vector<16x32xf32> to vector<16x32xbf16>
    %cst_106 = arith.constant dense<0.000000e+00> : vector<16x128xf32>
    %289 = tpu.matmul %288, %166, %cst_106 {dimension_numbers = #tpu.dot_dimension_numbers<[1], [0], [0], [1], [0, 0, 1, 1], [], []>} : vector<16x32xbf16>, vector<32x128xbf16>, vector<16x128xf32> -> vector<16x128xf32>
    %290 = vector.broadcast %162 : vector<1x128xf32> to vector<16x128xf32>
    %291 = arith.addf %289, %290 : vector<16x128xf32>
    %cst_107 = arith.constant 5.000000e-01 : f32
    %292 = vector.broadcast %cst_107 : f32 to vector<16x128xf32>
    %293 = arith.mulf %292, %291 : vector<16x128xf32>
    %294 = arith.mulf %291, %291 : vector<16x128xf32>
    %295 = arith.mulf %291, %294 : vector<16x128xf32>
    %cst_108 = arith.constant 4.471500e-02 : f32
    %296 = vector.broadcast %cst_108 : f32 to vector<16x128xf32>
    %297 = arith.mulf %296, %295 : vector<16x128xf32>
    %298 = arith.addf %291, %297 : vector<16x128xf32>
    %cst_109 = arith.constant 0.797884583 : f32
    %299 = vector.broadcast %cst_109 : f32 to vector<16x128xf32>
    %300 = arith.mulf %299, %298 : vector<16x128xf32>
    %301 = math.tanh %300 : vector<16x128xf32>
    %cst_110 = arith.constant 1.000000e+00 : f32
    %302 = vector.broadcast %cst_110 : f32 to vector<16x128xf32>
    %303 = arith.addf %302, %301 : vector<16x128xf32>
    %304 = arith.mulf %293, %303 : vector<16x128xf32>
    %305 = arith.truncf %304 : vector<16x128xf32> to vector<16x128xbf16>
    %cst_111 = arith.constant dense<0.000000e+00> : vector<16x32xf32>
    %306 = tpu.matmul %305, %167, %cst_111 {dimension_numbers = #tpu.dot_dimension_numbers<[1], [1], [0], [0], [0, 0, 1, 0], [], []>} : vector<16x128xbf16>, vector<32x128xbf16>, vector<16x32xf32> -> vector<16x32xf32>
    %307 = vector.broadcast %163 : vector<1x32xf32> to vector<16x32xf32>
    %308 = arith.addf %306, %307 : vector<16x32xf32>
    %309 = arith.addf %265, %308 : vector<16x32xf32>
    %c8 = arith.constant 8 : index
    %c0_112 = arith.constant 0 : index
    %310 = vector.load %arg4[%c8, %c0_112] : memref<9x128xf32, #tpu.memory_space<vmem>>, vector<1x32xf32>
    %c8_113 = arith.constant 8 : index
    %c32_114 = arith.constant 32 : index
    %311 = vector.load %arg4[%c8_113, %c32_114] : memref<9x128xf32, #tpu.memory_space<vmem>>, vector<1x32xf32>
    %cst_115 = arith.constant dense<0.000000e+00> : vector<16xf32>
    %312 = vector.multi_reduction <add>, %309, %cst_115 [1] : vector<16x32xf32> to vector<16xf32>
    %313 = vector.shape_cast %312 : vector<16xf32> to vector<16x1xf32>
    %cst_116 = arith.constant 3.200000e+01 : f32
    %314 = vector.broadcast %cst_116 : f32 to vector<16x1xf32>
    %315 = arith.divf %313, %314 : vector<16x1xf32>
    %316 = vector.broadcast %315 : vector<16x1xf32> to vector<16x32xf32>
    %317 = arith.subf %309, %316 : vector<16x32xf32>
    %318 = arith.mulf %317, %317 : vector<16x32xf32>
    %cst_117 = arith.constant dense<0.000000e+00> : vector<16xf32>
    %319 = vector.multi_reduction <add>, %318, %cst_117 [1] : vector<16x32xf32> to vector<16xf32>
    %320 = vector.shape_cast %319 : vector<16xf32> to vector<16x1xf32>
    %cst_118 = arith.constant 3.200000e+01 : f32
    %321 = vector.broadcast %cst_118 : f32 to vector<16x1xf32>
    %322 = arith.divf %320, %321 : vector<16x1xf32>
    %323 = vector.broadcast %315 : vector<16x1xf32> to vector<16x32xf32>
    %324 = arith.subf %309, %323 : vector<16x32xf32>
    %cst_119 = arith.constant 9.99999974E-6 : f32
    %325 = vector.broadcast %cst_119 : f32 to vector<16x1xf32>
    %326 = arith.addf %322, %325 : vector<16x1xf32>
    %327 = math.rsqrt %326 : vector<16x1xf32>
    %328 = vector.broadcast %327 : vector<16x1xf32> to vector<16x32xf32>
    %329 = arith.mulf %324, %328 : vector<16x32xf32>
    %330 = vector.broadcast %310 : vector<1x32xf32> to vector<16x32xf32>
    %331 = arith.mulf %329, %330 : vector<16x32xf32>
    %332 = vector.broadcast %311 : vector<1x32xf32> to vector<16x32xf32>
    %333 = arith.addf %331, %332 : vector<16x32xf32>
    %334 = arith.truncf %333 : vector<16x32xf32> to vector<16x32xbf16>
    %c0_120 = arith.constant 0 : index
    %c0_121 = arith.constant 0 : index
    %335 = vector.load %arg2[%c0_120, %c0_121] : memref<128x32xbf16, #tpu.memory_space<vmem>>, vector<128x32xbf16>
    %cst_122 = arith.constant dense<0.000000e+00> : vector<16x128xf32>
    %336 = tpu.matmul %334, %335, %cst_122 {dimension_numbers = #tpu.dot_dimension_numbers<[1], [1], [0], [0], [0, 0, 1, 0], [], []>} : vector<16x32xbf16>, vector<128x32xbf16>, vector<16x128xf32> -> vector<16x128xf32>
    %c0_123 = arith.constant 0 : index
    %c0_124 = arith.constant 0 : index
    %337 = vector.load %arg5[%c0_123, %c0_124] : memref<16x128xf32, #tpu.memory_space<vmem>>, vector<16x128xf32>
    tpu.vector_store %arg5[%c0_123, %c0_124], %336 {strides = array<i32>} : memref<16x128xf32, #tpu.memory_space<vmem>>, vector<16x128xf32>,
    return
  }
}

</mosaic_0001>

<llo_original>
// kernel: gpt_forward.1
$region0: #{gpt_forward.1}
  #allocation0 [shape = 'u32[]', space=smem, size = 0x4, offset = 0x4, fixed_abs, tag = 'smem constant byte address 0x4 - core index']
  #allocation1 [shape = 'u32[72,128]{1,0:T(1,128)}', space=vmem, size = 0x9000, scoped, tag = 'internal scratch']
  %s0 = inlined_call_operand.vmem [shape: f32[16,32], index: 0, kind: input, shape index: {}]
  %s1 = inlined_call_operand.vmem [shape: f32[64,8], index: 1, kind: input, shape index: {}]
  %s2 = inlined_call_operand.vmem [shape: bf16[128,32], index: 2, kind: input, shape index: {}]
  %s3 = inlined_call_operand.vmem [shape: bf16[192,128], index: 3, kind: input, shape index: {}]
  %s4 = inlined_call_operand.vmem [shape: f32[9,128], index: 4, kind: input, shape index: {}]
  %s5 = inlined_call_operand.hbm [shape: f32[16,128], index: 5, kind: output, shape index: {}]
  %s6 = sld [smem:[#allocation0]]
  $region30: #{gpt_forward.1} parent=0
    _
  %s8 = ssub.s32 1, %s6
  %s9 = scalar_select 0, %s8, %s6
  $region1: #{gpt_forward.1} parent=0
    #allocation2 [shape = 'u8[8192]{0}', space=vmem, size = 0x2000, scoped, tag = 'output window, operand 0, single buffered']
    #allocation3 [shape = 's32[1]{0}', space=sflag, size = 0x4, scoped, tag = 'scoped memory for gpt_forward.1']
    %10 = vsyncpa [#allocation3], 0
    // Predicated region
    $region2: #{gpt_forward.1} parent=1 // pred_check
      _
    $region3: #{gpt_forward.1} parent=1 // pred_check_branch
      %12 = sbr.rel (0) target = $region5
    $region4: #{gpt_forward.1} parent=1 // pred_region
      _
    $region5: #{gpt_forward.1} parent=1 // pred_fallthru
      _
    // Predicated region
    $region6: #{gpt_forward.1} parent=1 // pred_check
      _
    $region7: #{gpt_forward.1} parent=1 // pred_check_branch
      %14 = sbr.rel (0) target = $region9
    $region8: #{gpt_forward.1} parent=1 // pred_region
      _
    $region9: #{gpt_forward.1} parent=1 // pred_fallthru
      _
    // Predicated region
    $region10: #{gpt_forward.1} parent=1 // pred_check
      _
    $region11: #{gpt_forward.1} parent=1 // pred_check_branch
      %16 = sbr.rel (0) target = $region13
    $region12: #{gpt_forward.1} parent=1 // pred_region
      _
    $region13: #{gpt_forward.1} parent=1 // pred_fallthru
      _
    // Predicated region
    $region14: #{gpt_forward.1} parent=1 // pred_check
      _
    $region15: #{gpt_forward.1} parent=1 // pred_check_branch
      %18 = sbr.rel (0) target = $region17
    $region16: #{gpt_forward.1} parent=1 // pred_region
      _
    $region17: #{gpt_forward.1} parent=1 // pred_fallthru
      _
    // Predicated region
    $region18: #{gpt_forward.1} parent=1 // pred_check
      _
    $region19: #{gpt_forward.1} parent=1 // pred_check_branch
      %20 = sbr.rel (0) target = $region21
    $region20: #{gpt_forward.1} parent=1 // pred_region
      _
    $region21: #{gpt_forward.1} parent=1 // pred_fallthru
      _
    %v22 = vld [vmem:[%s0] sm:$0xff]
    %v23 = vld [vmem:[%s0 + $0x8] sm:$0xff]
    %v24 = vld [vmem:[%s1] sm:$0xff]
    %v25 = vld [vmem:[%s1 + $0x8] sm:$0xff]
    %v26 = vld [vmem:[%s1 + $0x10] sm:$0xff]
    %v27 = vld [vmem:[%s1 + $0x18] sm:$0xff]
    %v28 = vld [vmem:[%s1 + $0x20] sm:$0xff]
    %v29 = vld [vmem:[%s1 + $0x28] sm:$0xff]
    %v30 = vld [vmem:[%s1 + $0x30] sm:$0xff]
    %v31 = vld [vmem:[%s1 + $0x38] sm:$0xff]
    %v32 = vld [vmem:[%s4] sm:$0x1]
    %v33 = vld [vmem:[%s4 + $0x1] sm:$0x1]
    %v34 = vld [vmem:[%s4 + $0x2] sm:$0x1]
    %v35 = vld [vmem:[%s4 + $0x3] sm:$0x1]
    %v36 = vld [vmem:[%s3] sm:$0xf]
    %v37 = vld [vmem:[%s3 + $0x4] sm:$0xf]
    %v38 = vld [vmem:[%s3 + $0x8] sm:$0xf]
    %v39 = vld [vmem:[%s3 + $0xc] sm:$0xf]
    %v40 = vld [vmem:[%s3 + $0x10] sm:$0xf]
    %v41 = vld [vmem:[%s3 + $0x14] sm:$0xf]
    %v42 = vld [vmem:[%s3 + $0x18] sm:$0xf]
    %v43 = vld [vmem:[%s3 + $0x1c] sm:$0xf]
    %v44 = vld [vmem:[%s3 + $0x20] sm:$0xf]
    %v45 = vld [vmem:[%s3 + $0x24] sm:$0xf]
    %v46 = vld [vmem:[%s3 + $0x28] sm:$0xf]
    %v47 = vld [vmem:[%s3 + $0x2c] sm:$0xf]
    %vm48 = vcmask 261120
    %v49 = vsel %vm48, %v22, 0.0
    %50 = vadd.xlane.f32.xlu0 %v49
    %v51 = vpop.xlane.xlu0 %50
    %v52 = vsel %vm48, %v23, 0.0
    %53 = vadd.xlane.f32.xlu0 %v52
    %v54 = vpop.xlane.xlu0 %53
    %v55 = vrcp.pop 32.0
    %v56 = vmul.f32 32.0, %v55
    %v57 = vsub.f32 1.0, %v56
    %v58 = vmul.f32 %v55, %v57
    %v59 = vadd.f32 %v55, %v58
    %vm60 = vweird.f32 %v55
    %v61 = vsel %vm60, %v55, %v59
    %v62 = vmul.f32 %v51, %v61
    %v63 = vmul.f32 %v54, %v61
    %v64 = vsub.f32 %v22, %v62
    %v65 = vsub.f32 %v23, %v63
    %v66 = vmul.f32 %v64, %v64
    %v67 = vmul.f32 %v65, %v65
    %v68 = vsel %vm48, %v66, 0.0
    %69 = vadd.xlane.f32.xlu0 %v68
    %v70 = vpop.xlane.xlu0 %69
    %v71 = vsel %vm48, %v67, 0.0
    %72 = vadd.xlane.f32.xlu0 %v71
    %v73 = vpop.xlane.xlu0 %72
    %v74 = vmul.f32 %v70, %v61
    %v75 = vmul.f32 %v73, %v61
    %v76 = vadd.f32 %v74, 1e-05
    %v77 = vadd.f32 %v75, 1e-05
    %v78 = vrsqrt.pop %v76
    %v79 = vmul.f32 %v78, %v76
    %v80 = vmul.f32 %v79, %v78
    %v81 = vmul.f32 0.5, %v80
    %v82 = vsub.f32 1.5, %v81
    %v83 = vmul.f32 %v78, %v82
    %vm84 = vweird.f32 %v76
    %vm85 = vweird.f32 %v78
    %vm86 = vmor %vm84, %vm85
    %v87 = vsel %vm86, %v78, %v83
    %v88 = vrsqrt.pop %v77
    %v89 = vmul.f32 %v88, %v77
    %v90 = vmul.f32 %v89, %v88
    %v91 = vmul.f32 0.5, %v90
    %v92 = vsub.f32 1.5, %v91
    %v93 = vmul.f32 %v88, %v92
    %vm94 = vweird.f32 %v77
    %vm95 = vweird.f32 %v88
    %vm96 = vmor %vm94, %vm95
    %v97 = vsel %vm96, %v88, %v93
    %v98 = vmul.f32 %v64, %v87
    %v99 = vmul.f32 %v65, %v97
    %v100 = vperm.slane %v32, 0
    %v101 = vmul.f32 %v98, %v100
    %v102 = vmul.f32 %v99, %v100
    %104 = vrot.lane.b32.xlu0 %v100, 96
    %v105 = vpop.permute.xlu0 %104
    %v107 = vadd.f32 %v101, %v105
    %v108 = vadd.f32 %v102, %v105
    %v109 = vpack.c.bf16 %v108, %v107
    %v110 = vperm.slane %v33, 0
    %v115 = vunpack.c.l.b16 %v36
    %v116 = vunpack.c.l.b16 %v37
    %v117 = vunpack.c.l.b16 %v38
    %v118 = vunpack.c.l.b16 %v39
    %v119 = vpack.c.b16 %v116, %v115
    %v120 = vpack.c.b16 %v118, %v117
    %v124 = vsel %vm48, %v109, 0
    %126 = vmatpush.bf16.msra.mxu0 0
    %127 = vmatpush.bf16.msra.mxu0 0
    %128 = vmatpush.bf16.msra.mxu0 0
    %129 = vmatpush.bf16.msra.mxu0 0
    %130 = vmatpush.bf16.msra.mxu0 0
    %131 = vmatpush.bf16.msra.mxu0 0
    %132 = vmatpush.bf16.msra.mxu0 %v120
    %133 = vmatpush.bf16.msra.mxu0 %v119
    %134 = vmatmul.bf16.gmra.mxu0 %v124
    %v135 = vpop.f32.mrf.mxu0
    %v136 = vadd.f32 %v110, %v135
    %v137 = vpop.f32.mrf.mxu0
    %v138 = vadd.f32 %v110, %v137
    %139 = vdwg.mxu0
    %v140 = vpack.c.bf16 %v136, %v136
    %v141 = vpack.c.bf16 %v138, %v138
    %v143 = vunpack.c.l.b16 %v140
    %v144 = vpack.c.b16 %v143, %v143
    %145 = vrot.lane.b32.xlu0 %v144, 96
    %v146 = vpop.permute.xlu0 %145
    %vm147 = vcmask 64512
    %v149 = vsel %vm147, %v140, 0
    %v152 = vsel %vm147, %v146, 0
    %154 = vmatpush.bf16.xpose.msra.mxu0 0
    %155 = vmatpush.bf16.xpose.msra.mxu0 0
    %156 = vmatpush.bf16.xpose.msra.mxu0 0
    %157 = vmatpush.bf16.xpose.msra.mxu0 0
    %158 = vmatpush.bf16.xpose.msra.mxu0 0
    %159 = vmatpush.bf16.xpose.msra.mxu0 0
    %160 = vmatpush.bf16.xpose.msra.mxu0 0
    %161 = vmatpush.bf16.xpose.msra.mxu0 %v152
    %162 = vmatmul.bf16.gmra.mxu0 %v149
    %v163 = vpop.f32.mrf.mxu0
    %v164 = vadd.f32 0.0, %v163
    %v165 = vpop.f32.mrf.mxu0
    %166 = vdwg.mxu0
    %167 = vrot.lane.b32.xlu0 %v144, 120
    %v168 = vpop.permute.xlu0 %167
    %169 = vrot.lane.b32.xlu0 %v144, 88
    %v170 = vpop.permute.xlu0 %169
    %v172 = vsel %vm147, %v168, 0
    %v175 = vsel %vm147, %v170, 0
    %177 = vmatpush.bf16.xpose.msra.mxu0 0
    %178 = vmatpush.bf16.xpose.msra.mxu0 0
    %179 = vmatpush.bf16.xpose.msra.mxu0 0
    %180 = vmatpush.bf16.xpose.msra.mxu0 0
    %181 = vmatpush.bf16.xpose.msra.mxu0 0
    %182 = vmatpush.bf16.xpose.msra.mxu0 0
    %183 = vmatpush.bf16.xpose.msra.mxu0 0
    %184 = vmatpush.bf16.xpose.msra.mxu0 %v175
    %185 = vmatmul.bf16.gmra.mxu0 %v172
    %v186 = vpop.f32.mrf.mxu0
    %v187 = vadd.f32 0.0, %v186
    %v188 = vpop.f32.mrf.mxu0
    %189 = vdwg.mxu0
    %190 = vrot.lane.b32.xlu0 %v144, 112
    %v191 = vpop.permute.xlu0 %190
    %192 = vrot.lane.b32.xlu0 %v144, 80
    %v193 = vpop.permute.xlu0 %192
    %v195 = vsel %vm147, %v191, 0
    %v198 = vsel %vm147, %v193, 0
    %200 = vmatpush.bf16.xpose.msra.mxu0 0
    %201 = vmatpush.bf16.xpose.msra.mxu0 0
    %202 = vmatpush.bf16.xpose.msra.mxu0 0
    %203 = vmatpush.bf16.xpose.msra.mxu0 0
    %204 = vmatpush.bf16.xpose.msra.mxu0 0
    %205 = vmatpush.bf16.xpose.msra.mxu0 0
    %206 = vmatpush.bf16.xpose.msra.mxu0 0
    %207 = vmatpush.bf16.xpose.msra.mxu0 %v198
    %208 = vmatmul.bf16.gmra.mxu0 %v195
    %v209 = vpop.f32.mrf.mxu0
    %v210 = vadd.f32 0.0, %v209
    %v211 = vpop.f32.mrf.mxu0
    %212 = vdwg.mxu0
    %213 = vrot.lane.b32.xlu0 %v144, 104
    %v214 = vpop.permute.xlu0 %213
    %215 = vrot.lane.b32.xlu0 %v144, 72
    %v216 = vpop.permute.xlu0 %215
    %v218 = vsel %vm147, %v214, 0
    %v221 = vsel %vm147, %v216, 0
    %223 = vmatpush.bf16.xpose.msra.mxu0 0
    %224 = vmatpush.bf16.xpose.msra.mxu0 0
    %225 = vmatpush.bf16.xpose.msra.mxu0 0
    %226 = vmatpush.bf16.xpose.msra.mxu0 0
    %227 = vmatpush.bf16.xpose.msra.mxu0 0
    %228 = vmatpush.bf16.xpose.msra.mxu0 0
    %229 = vmatpush.bf16.xpose.msra.mxu0 0
    %230 = vmatpush.bf16.xpose.msra.mxu0 %v221
    %231 = vmatmul.bf16.gmra.mxu0 %v218
    %v232 = vpop.f32.mrf.mxu0
    %v233 = vadd.f32 0.0, %v232
    %v234 = vpop.f32.mrf.mxu0
    %235 = vdwg.mxu0
    %v237 = vunpack.c.l.b16 %v141
    %v238 = vpack.c.b16 %v237, %v237
    %239 = vrot.lane.b32.xlu0 %v238, 96
    %v240 = vpop.permute.xlu0 %239
    %v242 = vsel %vm147, %v141, 0
    %v245 = vsel %vm147, %v240, 0
    %247 = vmatpush.bf16.xpose.msra.mxu0 0
    %248 = vmatpush.bf16.xpose.msra.mxu0 0
    %249 = vmatpush.bf16.xpose.msra.mxu0 0
    %250 = vmatpush.bf16.xpose.msra.mxu0 0
    %251 = vmatpush.bf16.xpose.msra.mxu0 0
    %252 = vmatpush.bf16.xpose.msra.mxu0 0
    %253 = vmatpush.bf16.xpose.msra.mxu0 0
    %254 = vmatpush.bf16.xpose.msra.mxu0 %v245
    %255 = vmatmul.bf16.gmra.mxu0 %v242
    %v256 = vpop.f32.mrf.mxu0
    %v257 = vadd.f32 0.0, %v256
    %v258 = vpop.f32.mrf.mxu0
    %259 = vdwg.mxu0
    %260 = vrot.lane.b32.xlu0 %v238, 120
    %v261 = vpop.permute.xlu0 %260
    %262 = vrot.lane.b32.xlu0 %v238, 88
    %v263 = vpop.permute.xlu0 %262
    %v265 = vsel %vm147, %v261, 0
    %v268 = vsel %vm147, %v263, 0
    %270 = vmatpush.bf16.xpose.msra.mxu0 0
    %271 = vmatpush.bf16.xpose.msra.mxu0 0
    %272 = vmatpush.bf16.xpose.msra.mxu0 0
    %273 = vmatpush.bf16.xpose.msra.mxu0 0
    %274 = vmatpush.bf16.xpose.msra.mxu0 0
    %275 = vmatpush.bf16.xpose.msra.mxu0 0
    %276 = vmatpush.bf16.xpose.msra.mxu0 0
    %277 = vmatpush.bf16.xpose.msra.mxu0 %v268
    %278 = vmatmul.bf16.gmra.mxu0 %v265
    %v279 = vpop.f32.mrf.mxu0
    %v280 = vadd.f32 0.0, %v279
    %v281 = vpop.f32.mrf.mxu0
    %282 = vdwg.mxu0
    %283 = vrot.lane.b32.xlu0 %v238, 112
    %v284 = vpop.permute.xlu0 %283
    %285 = vrot.lane.b32.xlu0 %v238, 80
    %v286 = vpop.permute.xlu0 %285
    %v288 = vsel %vm147, %v284, 0
    %v291 = vsel %vm147, %v286, 0
    %293 = vmatpush.bf16.xpose.msra.mxu0 0
    %294 = vmatpush.bf16.xpose.msra.mxu0 0
    %295 = vmatpush.bf16.xpose.msra.mxu0 0
    %296 = vmatpush.bf16.xpose.msra.mxu0 0
    %297 = vmatpush.bf16.xpose.msra.mxu0 0
    %298 = vmatpush.bf16.xpose.msra.mxu0 0
    %299 = vmatpush.bf16.xpose.msra.mxu0 0
    %300 = vmatpush.bf16.xpose.msra.mxu0 %v291
    %301 = vmatmul.bf16.gmra.mxu0 %v288
    %v302 = vpop.f32.mrf.mxu0
    %v303 = vadd.f32 0.0, %v302
    %v304 = vpop.f32.mrf.mxu0
    %305 = vdwg.mxu0
    %306 = vrot.lane.b32.xlu0 %v238, 104
    %v307 = vpop.permute.xlu0 %306
    %308 = vrot.lane.b32.xlu0 %v238, 72
    %v309 = vpop.permute.xlu0 %308
    %v311 = vsel %vm147, %v307, 0
    %v314 = vsel %vm147, %v309, 0
    %316 = vmatpush.bf16.xpose.msra.mxu0 0
    %317 = vmatpush.bf16.xpose.msra.mxu0 0
    %318 = vmatpush.bf16.xpose.msra.mxu0 0
    %319 = vmatpush.bf16.xpose.msra.mxu0 0
    %320 = vmatpush.bf16.xpose.msra.mxu0 0
    %321 = vmatpush.bf16.xpose.msra.mxu0 0
    %322 = vmatpush.bf16.xpose.msra.mxu0 0
    %323 = vmatpush.bf16.xpose.msra.mxu0 %v314
    %324 = vmatmul.bf16.gmra.mxu0 %v311
    %v325 = vpop.f32.mrf.mxu0
    %v326 = vadd.f32 0.0, %v325
    %v327 = vpop.f32.mrf.mxu0
    %328 = vdwg.mxu0
    %v329 = vmul.f32 %v164, 0.35355338
    %v330 = vmul.f32 %v187, 0.35355338
    %v331 = vmul.f32 %v210, 0.35355338
    %v332 = vmul.f32 %v233, 0.35355338
    %v333 = vmul.f32 %v257, 0.35355338
    %v334 = vmul.f32 %v280, 0.35355338
    %v335 = vmul.f32 %v303, 0.35355338
    %v336 = vmul.f32 %v326, 0.35355338
    %v337 = vadd.f32 %v329, %v24
    %v338 = vadd.f32 %v330, %v25
    %v339 = vadd.f32 %v331, %v26
    %v340 = vadd.f32 %v332, %v27
    %v341 = vadd.f32 %v333, %v28
    %v342 = vadd.f32 %v334, %v29
    %v343 = vadd.f32 %v335, %v30
    %v344 = vadd.f32 %v336, %v31
    %v345 = vsel %vm147, %v337, -inf
    %346 = vmax.xlane.f32.xlu0 %v345
    %v347 = vpop.xlane.xlu0 %346
    %v348 = vsel %vm147, %v338, -inf
    %349 = vmax.xlane.f32.xlu0 %v348
    %v350 = vpop.xlane.xlu0 %349
    %v351 = vsel %vm147, %v339, -inf
    %352 = vmax.xlane.f32.xlu0 %v351
    %v353 = vpop.xlane.xlu0 %352
    %v354 = vsel %vm147, %v340, -inf
    %355 = vmax.xlane.f32.xlu0 %v354
    %v356 = vpop.xlane.xlu0 %355
    %v357 = vsel %vm147, %v341, -inf
    %358 = vmax.xlane.f32.xlu0 %v357
    %v359 = vpop.xlane.xlu0 %358
    %v360 = vsel %vm147, %v342, -inf
    %361 = vmax.xlane.f32.xlu0 %v360
    %v362 = vpop.xlane.xlu0 %361
    %v363 = vsel %vm147, %v343, -inf
    %364 = vmax.xlane.f32.xlu0 %v363
    %v365 = vpop.xlane.xlu0 %364
    %v366 = vsel %vm147, %v344, -inf
    %367 = vmax.xlane.f32.xlu0 %v366
    %v368 = vpop.xlane.xlu0 %367
    %v369 = vsub.f32 %v337, %v347
    %v370 = vsub.f32 %v338, %v350
    %v371 = vsub.f32 %v339, %v353
    %v372 = vsub.f32 %v340, %v356
    %v373 = vsub.f32 %v341, %v359
    %v374 = vsub.f32 %v342, %v362
    %v375 = vsub.f32 %v343, %v365
    %v376 = vsub.f32 %v344, %v368
    %v377 = vmul.f32 %v369, 1.442695
    %v378 = vpow.pop %v377
    %v379 = vmul.f32 %v370, 1.442695
    %v380 = vpow.pop %v379
    %v381 = vmul.f32 %v371, 1.442695
    %v382 = vpow.pop %v381
    %v383 = vmul.f32 %v372, 1.442695
    %v384 = vpow.pop %v383
    %v385 = vmul.f32 %v373, 1.442695
    %v386 = vpow.pop %v385
    %v387 = vmul.f32 %v374, 1.442695
    %v388 = vpow.pop %v387
    %v389 = vmul.f32 %v375, 1.442695
    %v390 = vpow.pop %v389
    %v391 = vmul.f32 %v376, 1.442695
    %v392 = vpow.pop %v391
    %v393 = vsel %vm147, %v378, 0.0
    %394 = vadd.xlane.f32.xlu0 %v393
    %v395 = vpop.xlane.xlu0 %394
    %v396 = vsel %vm147, %v380, 0.0
    %397 = vadd.xlane.f32.xlu0 %v396
    %v398 = vpop.xlane.xlu0 %397
    %v399 = vsel %vm147, %v382, 0.0
    %400 = vadd.xlane.f32.xlu0 %v399
    %v401 = vpop.xlane.xlu0 %400
    %v402 = vsel %vm147, %v384, 0.0
    %403 = vadd.xlane.f32.xlu0 %v402
    %v404 = vpop.xlane.xlu0 %403
    %v405 = vsel %vm147, %v386, 0.0
    %406 = vadd.xlane.f32.xlu0 %v405
    %v407 = vpop.xlane.xlu0 %406
    %v408 = vsel %vm147, %v388, 0.0
    %409 = vadd.xlane.f32.xlu0 %v408
    %v410 = vpop.xlane.xlu0 %409
    %v411 = vsel %vm147, %v390, 0.0
    %412 = vadd.xlane.f32.xlu0 %v411
    %v413 = vpop.xlane.xlu0 %412
    %v414 = vsel %vm147, %v392, 0.0
    %415 = vadd.xlane.f32.xlu0 %v414
    %v416 = vpop.xlane.xlu0 %415
    %v417 = vrcp.pop %v395
    %v418 = vmul.f32 %v395, %v417
    %v419 = vsub.f32 1.0, %v418
    %v420 = vmul.f32 %v417, %v419
    %v421 = vadd.f32 %v417, %v420
    %vm422 = vweird.f32 %v395
    %vm423 = vweird.f32 %v417
    %vm424 = vmor %vm422, %vm423
    %v425 = vsel %vm424, %v417, %v421
    %v426 = vand.u32 2147483647, %v395
    %vm427 = vcmp.eq.f32.partialorder %v426, 8.507059e+37
    %v428 = vand.u32 %v395, 2147483648
    %v429 = vor.u32 1.1754944e-38, %v428
    %v430 = vsel %vm427, %v429, %v425
    %v431 = vrcp.pop %v398
    %v432 = vmul.f32 %v398, %v431
    %v433 = vsub.f32 1.0, %v432
    %v434 = vmul.f32 %v431, %v433
    %v435 = vadd.f32 %v431, %v434
    %vm436 = vweird.f32 %v398
    %vm437 = vweird.f32 %v431
    %vm438 = vmor %vm436, %vm437
    %v439 = vsel %vm438, %v431, %v435
    %v440 = vand.u32 2147483647, %v398
    %vm441 = vcmp.eq.f32.partialorder %v440, 8.507059e+37
    %v442 = vand.u32 %v398, 2147483648
    %v443 = vor.u32 1.1754944e-38, %v442
    %v444 = vsel %vm441, %v443, %v439
    %v445 = vrcp.pop %v401
    %v446 = vmul.f32 %v401, %v445
    %v447 = vsub.f32 1.0, %v446
    %v448 = vmul.f32 %v445, %v447
    %v449 = vadd.f32 %v445, %v448
    %vm450 = vweird.f32 %v401
    %vm451 = vweird.f32 %v445
    %vm452 = vmor %vm450, %vm451
    %v453 = vsel %vm452, %v445, %v449
    %v454 = vand.u32 2147483647, %v401
    %vm455 = vcmp.eq.f32.partialorder %v454, 8.507059e+37
    %v456 = vand.u32 %v401, 2147483648
    %v457 = vor.u32 1.1754944e-38, %v456
    %v458 = vsel %vm455, %v457, %v453
    %v459 = vrcp.pop %v404
    %v460 = vmul.f32 %v404, %v459
    %v461 = vsub.f32 1.0, %v460
    %v462 = vmul.f32 %v459, %v461
    %v463 = vadd.f32 %v459, %v462
    %vm464 = vweird.f32 %v404
    %vm465 = vweird.f32 %v459
    %vm466 = vmor %vm464, %vm465
    %v467 = vsel %vm466, %v459, %v463
    %v468 = vand.u32 2147483647, %v404
    %vm469 = vcmp.eq.f32.partialorder %v468, 8.507059e+37
    %v470 = vand.u32 %v404, 2147483648
    %v471 = vor.u32 1.1754944e-38, %v470
    %v472 = vsel %vm469, %v471, %v467
    %v473 = vrcp.pop %v407
    %v474 = vmul.f32 %v407, %v473
    %v475 = vsub.f32 1.0, %v474
    %v476 = vmul.f32 %v473, %v475
    %v477 = vadd.f32 %v473, %v476
    %vm478 = vweird.f32 %v407
    %vm479 = vweird.f32 %v473
    %vm480 = vmor %vm478, %vm479
    %v481 = vsel %vm480, %v473, %v477
    %v482 = vand.u32 2147483647, %v407
    %vm483 = vcmp.eq.f32.partialorder %v482, 8.507059e+37
    %v484 = vand.u32 %v407, 2147483648
    %v485 = vor.u32 1.1754944e-38, %v484
    %v486 = vsel %vm483, %v485, %v481
    %v487 = vrcp.pop %v410
    %v488 = vmul.f32 %v410, %v487
    %v489 = vsub.f32 1.0, %v488
    %v490 = vmul.f32 %v487, %v489
    %v491 = vadd.f32 %v487, %v490
    %vm492 = vweird.f32 %v410
    %vm493 = vweird.f32 %v487
    %vm494 = vmor %vm492, %vm493
    %v495 = vsel %vm494, %v487, %v491
    %v496 = vand.u32 2147483647, %v410
    %vm497 = vcmp.eq.f32.partialorder %v496, 8.507059e+37
    %v498 = vand.u32 %v410, 2147483648
    %v499 = vor.u32 1.1754944e-38, %v498
    %v500 = vsel %vm497, %v499, %v495
    %v501 = vrcp.pop %v413
    %v502 = vmul.f32 %v413, %v501
    %v503 = vsub.f32 1.0, %v502
    %v504 = vmul.f32 %v501, %v503
    %v505 = vadd.f32 %v501, %v504
    %vm506 = vweird.f32 %v413
    %vm507 = vweird.f32 %v501
    %vm508 = vmor %vm506, %vm507
    %v509 = vsel %vm508, %v501, %v505
    %v510 = vand.u32 2147483647, %v413
    %vm511 = vcmp.eq.f32.partialorder %v510, 8.507059e+37
    %v512 = vand.u32 %v413, 2147483648
    %v513 = vor.u32 1.1754944e-38, %v512
    %v514 = vsel %vm511, %v513, %v509
    %v515 = vrcp.pop %v416
    %v516 = vmul.f32 %v416, %v515
    %v517 = vsub.f32 1.0, %v516
    %v518 = vmul.f32 %v515, %v517
    %v519 = vadd.f32 %v515, %v518
    %vm520 = vweird.f32 %v416
    %vm521 = vweird.f32 %v515
    %vm522 = vmor %vm520, %vm521
    %v523 = vsel %vm522, %v515, %v519
    %v524 = vand.u32 2147483647, %v416
    %vm525 = vcmp.eq.f32.partialorder %v524, 8.507059e+37
    %v526 = vand.u32 %v416, 2147483648
    %v527 = vor.u32 1.1754944e-38, %v526
    %v528 = vsel %vm525, %v527, %v523
    %v529 = vmul.f32 %v378, %v430
    %v530 = vmul.f32 %v380, %v444
    %v531 = vmul.f32 %v382, %v458
    %v532 = vmul.f32 %v384, %v472
    %v533 = vmul.f32 %v386, %v486
    %v534 = vmul.f32 %v388, %v500
    %v535 = vmul.f32 %v390, %v514
    %v536 = vmul.f32 %v392, %v528
    %v537 = vpack.c.bf16 %v529, %v529
    %v538 = vpack.c.bf16 %v530, %v530
    %v539 = vpack.c.bf16 %v531, %v531
    %v540 = vpack.c.bf16 %v532, %v532
    %v541 = vpack.c.bf16 %v533, %v533
    %v542 = vpack.c.bf16 %v534, %v534
    %v543 = vpack.c.bf16 %v535, %v535
    %v544 = vpack.c.bf16 %v536, %v536
    %545 = vrot.lane.b32.xlu0 %v144, 64
    %v546 = vpop.permute.xlu0 %545
    %v548 = vsel %vm147, %v537, 0
    %vm550 = vcmask 1043456
    %v552 = vsel %vm550, %v546, 0
    %554 = vmatpush.bf16.msra.mxu0 0
    %555 = vmatpush.bf16.msra.mxu0 0
    %556 = vmatpush.bf16.msra.mxu0 0
    %557 = vmatpush.bf16.msra.mxu0 0
    %558 = vmatpush.bf16.msra.mxu0 0
    %559 = vmatpush.bf16.msra.mxu0 0
    %560 = vmatpush.bf16.msra.mxu0 0
    %561 = vmatpush.bf16.msra.mxu0 %v552
    %562 = vmatmul.bf16.gmra.mxu0 %v548
    %v563 = vpop.f32.mrf.mxu0
    %v564 = vadd.f32 0.0, %v563
    %v565 = vpop.f32.mrf.mxu0
    %566 = vdwg.mxu0
    %567 = vrot.lane.b32.xlu0 %v144, 56
    %v568 = vpop.permute.xlu0 %567
    %v570 = vsel %vm147, %v538, 0
    %v573 = vsel %vm550, %v568, 0
    %575 = vmatpush.bf16.msra.mxu0 0
    %576 = vmatpush.bf16.msra.mxu0 0
    %577 = vmatpush.bf16.msra.mxu0 0
    %578 = vmatpush.bf16.msra.mxu0 0
    %579 = vmatpush.bf16.msra.mxu0 0
    %580 = vmatpush.bf16.msra.mxu0 0
    %581 = vmatpush.bf16.msra.mxu0 0
    %582 = vmatpush.bf16.msra.mxu0 %v573
    %583 = vmatmul.bf16.gmra.mxu0 %v570
    %v584 = vpop.f32.mrf.mxu0
    %v585 = vadd.f32 0.0, %v584
    %v586 = vpop.f32.mrf.mxu0
    %587 = vdwg.mxu0
    %588 = vrot.lane.b32.xlu0 %v144, 48
    %v589 = vpop.permute.xlu0 %588
    %v591 = vsel %vm147, %v539, 0
    %v594 = vsel %vm550, %v589, 0
    %596 = vmatpush.bf16.msra.mxu0 0
    %597 = vmatpush.bf16.msra.mxu0 0
    %598 = vmatpush.bf16.msra.mxu0 0
    %599 = vmatpush.bf16.msra.mxu0 0
    %600 = vmatpush.bf16.msra.mxu0 0
    %601 = vmatpush.bf16.msra.mxu0 0
    %602 = vmatpush.bf16.msra.mxu0 0
    %603 = vmatpush.bf16.msra.mxu0 %v594
    %604 = vmatmul.bf16.gmra.mxu0 %v591
    %v605 = vpop.f32.mrf.mxu0
    %v606 = vadd.f32 0.0, %v605
    %v607 = vpop.f32.mrf.mxu0
    %608 = vdwg.mxu0
    %609 = vrot.lane.b32.xlu0 %v144, 40
    %v610 = vpop.permute.xlu0 %609
    %v612 = vsel %vm147, %v540, 0
    %v615 = vsel %vm550, %v610, 0
    %617 = vmatpush.bf16.msra.mxu0 0
    %618 = vmatpush.bf16.msra.mxu0 0
    %619 = vmatpush.bf16.msra.mxu0 0
    %620 = vmatpush.bf16.msra.mxu0 0
    %621 = vmatpush.bf16.msra.mxu0 0
    %622 = vmatpush.bf16.msra.mxu0 0
    %623 = vmatpush.bf16.msra.mxu0 0
    %624 = vmatpush.bf16.msra.mxu0 %v615
    %625 = vmatmul.bf16.gmra.mxu0 %v612
    %v626 = vpop.f32.mrf.mxu0
    %v627 = vadd.f32 0.0, %v626
    %v628 = vpop.f32.mrf.mxu0
    %629 = vdwg.mxu0
    %631 = vrot.lane.b32.xlu0 %v585, 8
    %v632 = vpop.permute.xlu0 %631
    %635 = vrot.lane.b32.xlu0 %v606, 16
    %v636 = vpop.permute.xlu0 %635
    %639 = vrot.lane.b32.xlu0 %v627, 24
    %v640 = vpop.permute.xlu0 %639
    %v642 = vsel %vm147, %v564, %v632
    %vm643 = vcmask 130048
    %v644 = vsel %vm643, %v642, %v636
    %vm645 = vcmask 195584
    %v646 = vsel %vm645, %v644, %v640
    %647 = vrot.lane.b32.xlu0 %v238, 64
    %v648 = vpop.permute.xlu0 %647
    %v650 = vsel %vm147, %v541, 0
    %v653 = vsel %vm550, %v648, 0
    %655 = vmatpush.bf16.msra.mxu0 0
    %656 = vmatpush.bf16.msra.mxu0 0
    %657 = vmatpush.bf16.msra.mxu0 0
    %658 = vmatpush.bf16.msra.mxu0 0
    %659 = vmatpush.bf16.msra.mxu0 0
    %660 = vmatpush.bf16.msra.mxu0 0
    %661 = vmatpush.bf16.msra.mxu0 0
    %662 = vmatpush.bf16.msra.mxu0 %v653
    %663 = vmatmul.bf16.gmra.mxu0 %v650
    %v664 = vpop.f32.mrf.mxu0
    %v665 = vadd.f32 0.0, %v664
    %v666 = vpop.f32.mrf.mxu0
    %667 = vdwg.mxu0
    %668 = vrot.lane.b32.xlu0 %v238, 56
    %v669 = vpop.permute.xlu0 %668
    %v671 = vsel %vm147, %v542, 0
    %v674 = vsel %vm550, %v669, 0
    %676 = vmatpush.bf16.msra.mxu0 0
    %677 = vmatpush.bf16.msra.mxu0 0
    %678 = vmatpush.bf16.msra.mxu0 0
    %679 = vmatpush.bf16.msra.mxu0 0
    %680 = vmatpush.bf16.msra.mxu0 0
    %681 = vmatpush.bf16.msra.mxu0 0
    %682 = vmatpush.bf16.msra.mxu0 0
    %683 = vmatpush.bf16.msra.mxu0 %v674
    %684 = vmatmul.bf16.gmra.mxu0 %v671
    %v685 = vpop.f32.mrf.mxu0
    %v686 = vadd.f32 0.0, %v685
    %v687 = vpop.f32.mrf.mxu0
    %688 = vdwg.mxu0
    %689 = vrot.lane.b32.xlu0 %v238, 48
    %v690 = vpop.permute.xlu0 %689
    %v692 = vsel %vm147, %v543, 0
    %v695 = vsel %vm550, %v690, 0
    %697 = vmatpush.bf16.msra.mxu0 0
    %698 = vmatpush.bf16.msra.mxu0 0
    %699 = vmatpush.bf16.msra.mxu0 0
    %700 = vmatpush.bf16.msra.mxu0 0
    %701 = vmatpush.bf16.msra.mxu0 0
    %702 = vmatpush.bf16.msra.mxu0 0
    %703 = vmatpush.bf16.msra.mxu0 0
    %704 = vmatpush.bf16.msra.mxu0 %v695
    %705 = vmatmul.bf16.gmra.mxu0 %v692
    %v706 = vpop.f32.mrf.mxu0
    %v707 = vadd.f32 0.0, %v706
    %v708 = vpop.f32.mrf.mxu0
    %709 = vdwg.mxu0
    %710 = vrot.lane.b32.xlu0 %v238, 40
    %v711 = vpop.permute.xlu0 %710
    %v713 = vsel %vm147, %v544, 0
    %v716 = vsel %vm550, %v711, 0
    %718 = vmatpush.bf16.msra.mxu0 0
    %719 = vmatpush.bf16.msra.mxu0 0
    %720 = vmatpush.bf16.msra.mxu0 0
    %721 = vmatpush.bf16.msra.mxu0 0
    %722 = vmatpush.bf16.msra.mxu0 0
    %723 = vmatpush.bf16.msra.mxu0 0
    %724 = vmatpush.bf16.msra.mxu0 0
    %725 = vmatpush.bf16.msra.mxu0 %v716
    %726 = vmatmul.bf16.gmra.mxu0 %v713
    %v727 = vpop.f32.mrf.mxu0
    %v728 = vadd.f32 0.0, %v727
    %v729 = vpop.f32.mrf.mxu0
    %730 = vdwg.mxu0
    %732 = vrot.lane.b32.xlu0 %v686, 8
    %v733 = vpop.permute.xlu0 %732
    %736 = vrot.lane.b32.xlu0 %v707, 16
    %v737 = vpop.permute.xlu0 %736
    %740 = vrot.lane.b32.xlu0 %v728, 24
    %v741 = vpop.permute.xlu0 %740
    %v743 = vsel %vm147, %v665, %v733
    %v744 = vsel %vm643, %v743, %v737
    %v745 = vsel %vm645, %v744, %v741
    %v746 = vpack.c.bf16 %v745, %v646
    %747 = vrot.lane.b32.xlu0 %v119, 32
    %v748 = vpop.permute.xlu0 %747
    %749 = vrot.lane.b32.xlu0 %v120, 32
    %v750 = vpop.permute.xlu0 %749
    %754 = vrot.lane.b32.xlu0 %v110, 32
    %v755 = vpop.permute.xlu0 %754
    %v758 = vsel %vm48, %v746, 0
    %760 = vmatpush.bf16.msra.mxu0 0
    %761 = vmatpush.bf16.msra.mxu0 0
    %762 = vmatpush.bf16.msra.mxu0 0
    %763 = vmatpush.bf16.msra.mxu0 0
    %764 = vmatpush.bf16.msra.mxu0 0
    %765 = vmatpush.bf16.msra.mxu0 0
    %766 = vmatpush.bf16.msra.mxu0 %v750
    %767 = vmatpush.bf16.msra.mxu0 %v748
    %768 = vmatmul.bf16.gmra.mxu0 %v758
    %v769 = vpop.f32.mrf.mxu0
    %v770 = vadd.f32 %v755, %v769
    %v771 = vpop.f32.mrf.mxu0
    %v772 = vadd.f32 %v755, %v771
    %773 = vdwg.mxu0
    %v774 = vadd.f32 %v22, %v770
    %v775 = vadd.f32 %v23, %v772
    %v776 = vsel %vm48, %v774, 0.0
    %777 = vadd.xlane.f32.xlu0 %v776
    %v778 = vpop.xlane.xlu0 %777
    %v779 = vsel %vm48, %v775, 0.0
    %780 = vadd.xlane.f32.xlu0 %v779
    %v781 = vpop.xlane.xlu0 %780
    %v782 = vmul.f32 %v778, %v61
    %v783 = vmul.f32 %v781, %v61
    %v784 = vsub.f32 %v774, %v782
    %v785 = vsub.f32 %v775, %v783
    %v786 = vmul.f32 %v784, %v784
    %v787 = vmul.f32 %v785, %v785
    %v788 = vsel %vm48, %v786, 0.0
    %789 = vadd.xlane.f32.xlu0 %v788
    %v790 = vpop.xlane.xlu0 %789
    %v791 = vsel %vm48, %v787, 0.0
    %792 = vadd.xlane.f32.xlu0 %v791
    %v793 = vpop.xlane.xlu0 %792
    %v794 = vmul.f32 %v790, %v61
    %v795 = vmul.f32 %v793, %v61
    %v796 = vadd.f32 %v794, 1e-05
    %v797 = vadd.f32 %v795, 1e-05
    %v798 = vrsqrt.pop %v796
    %v799 = vmul.f32 %v798, %v796
    %v800 = vmul.f32 %v799, %v798
    %v801 = vmul.f32 0.5, %v800
    %v802 = vsub.f32 1.5, %v801
    %v803 = vmul.f32 %v798, %v802
    %vm804 = vweird.f32 %v796
    %vm805 = vweird.f32 %v798
    %vm806 = vmor %vm804, %vm805
    %v807 = vsel %vm806, %v798, %v803
    %v808 = vrsqrt.pop %v797
    %v809 = vmul.f32 %v808, %v797
    %v810 = vmul.f32 %v809, %v808
    %v811 = vmul.f32 0.5, %v810
    %v812 = vsub.f32 1.5, %v811
    %v813 = vmul.f32 %v808, %v812
    %vm814 = vweird.f32 %v797
    %vm815 = vweird.f32 %v808
    %vm816 = vmor %vm814, %vm815
    %v817 = vsel %vm816, %v808, %v813
    %v818 = vmul.f32 %v784, %v807
    %v819 = vmul.f32 %v785, %v817
    %820 = vrot.lane.b32.xlu0 %v100, 64
    %v821 = vpop.permute.xlu0 %820
    %v823 = vmul.f32 %v818, %v821
    %v824 = vmul.f32 %v819, %v821
    %825 = vrot.lane.b32.xlu0 %v100, 32
    %v826 = vpop.permute.xlu0 %825
    %v828 = vadd.f32 %v823, %v826
    %v829 = vadd.f32 %v824, %v826
    %v830 = vpack.c.bf16 %v829, %v828
    %v831 = vperm.slane %v34, 0
    %v836 = vunpack.c.l.b16 %v40
    %v837 = vunpack.c.l.b16 %v41
    %v838 = vunpack.c.l.b16 %v42
    %v839 = vunpack.c.l.b16 %v43
    %v840 = vpack.c.b16 %v837, %v836
    %v841 = vpack.c.b16 %v839, %v838
    %v845 = vsel %vm48, %v830, 0
    %847 = vmatpush.bf16.msra.mxu0 0
    %848 = vmatpush.bf16.msra.mxu0 0
    %849 = vmatpush.bf16.msra.mxu0 0
    %850 = vmatpush.bf16.msra.mxu0 0
    %851 = vmatpush.bf16.msra.mxu0 0
    %852 = vmatpush.bf16.msra.mxu0 0
    %853 = vmatpush.bf16.msra.mxu0 %v841
    %854 = vmatpush.bf16.msra.mxu0 %v840
    %855 = vmatmul.bf16.gmra.mxu0 %v845
    %v856 = vpop.f32.mrf.mxu0
    %v857 = vadd.f32 %v831, %v856
    %v858 = vpop.f32.mrf.mxu0
    %v859 = vadd.f32 %v831, %v858
    %860 = vdwg.mxu0
    %v861 = vmul.f32 %v857, 0.5
    %v862 = vmul.f32 %v859, 0.5
    %v863 = vmul.f32 %v857, %v857
    %v864 = vmul.f32 %v859, %v859
    %v865 = vmul.f32 %v857, %v863
    %v866 = vmul.f32 %v859, %v864
    %v867 = vmul.f32 %v865, 0.044715
    %v868 = vmul.f32 %v866, 0.044715
    %v869 = vadd.f32 %v857, %v867
    %v870 = vadd.f32 %v859, %v868
    %v871 = vmul.f32 %v869, 0.7978846
    %v872 = vmul.f32 %v870, 0.7978846
    %v873 = vtanh.pop %v871
    %v874 = vtanh.pop %v872
    %v875 = vadd.f32 %v873, 1.0
    %v876 = vadd.f32 %v874, 1.0
    %v877 = vmul.f32 %v861, %v875
    %v878 = vmul.f32 %v862, %v876
    %v879 = vpack.c.bf16 %v878, %v877
    %v880 = vperm.slane %v35, 0
    %v885 = vunpack.c.l.b16 %v44
    %v886 = vunpack.c.l.b16 %v45
    %v887 = vunpack.c.l.b16 %v46
    %v888 = vunpack.c.l.b16 %v47
    %v889 = vpack.c.b16 %v886, %v885
    %v890 = vpack.c.b16 %v888, %v887
    %893 = vmatpush.bf16.xpose.msra.mxu0 0
    %894 = vmatpush.bf16.xpose.msra.mxu0 0
    %895 = vmatpush.bf16.xpose.msra.mxu0 0
    %896 = vmatpush.bf16.xpose.msra.mxu0 0
    %897 = vmatpush.bf16.xpose.msra.mxu0 0
    %898 = vmatpush.bf16.xpose.msra.mxu0 0
    %899 = vmatpush.bf16.xpose.msra.mxu0 %v890
    %900 = vmatpush.bf16.xpose.msra.mxu0 %v889
    %901 = vmatmul.bf16.gmra.mxu0 %v879
    %v902 = vpop.f32.mrf.mxu0
    %v903 = vadd.f32 %v880, %v902
    %v904 = vpop.f32.mrf.mxu0
    %v905 = vadd.f32 %v880, %v904
    %906 = vdwg.mxu0
    %v907 = vadd.f32 %v774, %v903
    %v908 = vadd.f32 %v775, %v905
    %v909 = vld [vmem:[%s4 + $0x4] sm:$0x1]
    %v910 = vld [vmem:[%s4 + $0x5] sm:$0x1]
    %v911 = vld [vmem:[%s4 + $0x6] sm:$0x1]
    %v912 = vld [vmem:[%s4 + $0x7] sm:$0x1]
    %v913 = vld [vmem:[%s3 + $0x30] sm:$0xf]
    %v914 = vld [vmem:[%s3 + $0x34] sm:$0xf]
    %v915 = vld [vmem:[%s3 + $0x38] sm:$0xf]
    %v916 = vld [vmem:[%s3 + $0x3c] sm:$0xf]
    %v917 = vld [vmem:[%s3 + $0x40] sm:$0xf]
    %v918 = vld [vmem:[%s3 + $0x44] sm:$0xf]
    %v919 = vld [vmem:[%s3 + $0x48] sm:$0xf]
    %v920 = vld [vmem:[%s3 + $0x4c] sm:$0xf]
    %v921 = vld [vmem:[%s3 + $0x50] sm:$0xf]
    %v922 = vld [vmem:[%s3 + $0x54] sm:$0xf]
    %v923 = vld [vmem:[%s3 + $0x58] sm:$0xf]
    %v924 = vld [vmem:[%s3 + $0x5c] sm:$0xf]
    %v925 = vsel %vm48, %v907, 0.0
    %926 = vadd.xlane.f32.xlu0 %v925
    %v927 = vpop.xlane.xlu0 %926
    %v928 = vsel %vm48, %v908, 0.0
    %929 = vadd.xlane.f32.xlu0 %v928
    %v930 = vpop.xlane.xlu0 %929
    %v931 = vmul.f32 %v927, %v61
    %v932 = vmul.f32 %v930, %v61
    %v933 = vsub.f32 %v907, %v931
    %v934 = vsub.f32 %v908, %v932
    %v935 = vmul.f32 %v933, %v933
    %v936 = vmul.f32 %v934, %v934
    %v937 = vsel %vm48, %v935, 0.0
    %938 = vadd.xlane.f32.xlu0 %v937
    %v939 = vpop.xlane.xlu0 %938
    %v940 = vsel %vm48, %v936, 0.0
    %941 = vadd.xlane.f32.xlu0 %v940
    %v942 = vpop.xlane.xlu0 %941
    %v943 = vmul.f32 %v939, %v61
    %v944 = vmul.f32 %v942, %v61
    %v945 = vadd.f32 %v943, 1e-05
    %v946 = vadd.f32 %v944, 1e-05
    %v947 = vrsqrt.pop %v945
    %v948 = vmul.f32 %v947, %v945
    %v949 = vmul.f32 %v948, %v947
    %v950 = vmul.f32 0.5, %v949
    %v951 = vsub.f32 1.5, %v950
    %v952 = vmul.f32 %v947, %v951
    %vm953 = vweird.f32 %v945
    %vm954 = vweird.f32 %v947
    %vm955 = vmor %vm953, %vm954
    %v956 = vsel %vm955, %v947, %v952
    %v957 = vrsqrt.pop %v946
    %v958 = vmul.f32 %v957, %v946
    %v959 = vmul.f32 %v958, %v957
    %v960 = vmul.f32 0.5, %v959
    %v961 = vsub.f32 1.5, %v960
    %v962 = vmul.f32 %v957, %v961
    %vm963 = vweird.f32 %v946
    %vm964 = vweird.f32 %v957
    %vm965 = vmor %vm963, %vm964
    %v966 = vsel %vm965, %v957, %v962
    %v967 = vmul.f32 %v933, %v956
    %v968 = vmul.f32 %v934, %v966
    %v969 = vperm.slane %v909, 0
    %v970 = vmul.f32 %v967, %v969
    %v971 = vmul.f32 %v968, %v969
    %973 = vrot.lane.b32.xlu0 %v969, 96
    %v974 = vpop.permute.xlu0 %973
    %v976 = vadd.f32 %v970, %v974
    %v977 = vadd.f32 %v971, %v974
    %v978 = vpack.c.bf16 %v977, %v976
    %v979 = vperm.slane %v910, 0
    %v984 = vunpack.c.l.b16 %v913
    %v985 = vunpack.c.l.b16 %v914
    %v986 = vunpack.c.l.b16 %v915
    %v987 = vunpack.c.l.b16 %v916
    %v988 = vpack.c.b16 %v985, %v984
    %v989 = vpack.c.b16 %v987, %v986
    %v993 = vsel %vm48, %v978, 0
    %995 = vmatpush.bf16.msra.mxu0 0
    %996 = vmatpush.bf16.msra.mxu0 0
    %997 = vmatpush.bf16.msra.mxu0 0
    %998 = vmatpush.bf16.msra.mxu0 0
    %999 = vmatpush.bf16.msra.mxu0 0
    %1000 = vmatpush.bf16.msra.mxu0 0
    %1001 = vmatpush.bf16.msra.mxu0 %v989
    %1002 = vmatpush.bf16.msra.mxu0 %v988
    %1003 = vmatmul.bf16.gmra.mxu0 %v993
    %v1004 = vpop.f32.mrf.mxu0
    %v1005 = vadd.f32 %v979, %v1004
    %v1006 = vpop.f32.mrf.mxu0
    %v1007 = vadd.f32 %v979, %v1006
    %1008 = vdwg.mxu0
    %v1009 = vpack.c.bf16 %v1005, %v1005
    %v1010 = vpack.c.bf16 %v1007, %v1007
    %v1012 = vunpack.c.l.b16 %v1009
    %v1013 = vpack.c.b16 %v1012, %v1012
    %1014 = vrot.lane.b32.xlu0 %v1013, 96
    %v1015 = vpop.permute.xlu0 %1014
    %v1017 = vsel %vm147, %v1009, 0
    %v1020 = vsel %vm147, %v1015, 0
    %1022 = vmatpush.bf16.xpose.msra.mxu0 0
    %1023 = vmatpush.bf16.xpose.msra.mxu0 0
    %1024 = vmatpush.bf16.xpose.msra.mxu0 0
    %1025 = vmatpush.bf16.xpose.msra.mxu0 0
    %1026 = vmatpush.bf16.xpose.msra.mxu0 0
    %1027 = vmatpush.bf16.xpose.msra.mxu0 0
    %1028 = vmatpush.bf16.xpose.msra.mxu0 0
    %1029 = vmatpush.bf16.xpose.msra.mxu0 %v1020
    %1030 = vmatmul.bf16.gmra.mxu0 %v1017
    %v1031 = vpop.f32.mrf.mxu0
    %v1032 = vadd.f32 0.0, %v1031
    %v1033 = vpop.f32.mrf.mxu0
    %1034 = vdwg.mxu0
    %1035 = vrot.lane.b32.xlu0 %v1013, 120
    %v1036 = vpop.permute.xlu0 %1035
    %1037 = vrot.lane.b32.xlu0 %v1013, 88
    %v1038 = vpop.permute.xlu0 %1037
    %v1040 = vsel %vm147, %v1036, 0
    %v1043 = vsel %vm147, %v1038, 0
    %1045 = vmatpush.bf16.xpose.msra.mxu0 0
    %1046 = vmatpush.bf16.xpose.msra.mxu0 0
    %1047 = vmatpush.bf16.xpose.msra.mxu0 0
    %1048 = vmatpush.bf16.xpose.msra.mxu0 0
    %1049 = vmatpush.bf16.xpose.msra.mxu0 0
    %1050 = vmatpush.bf16.xpose.msra.mxu0 0
    %1051 = vmatpush.bf16.xpose.msra.mxu0 0
    %1052 = vmatpush.bf16.xpose.msra.mxu0 %v1043
    %1053 = vmatmul.bf16.gmra.mxu0 %v1040
    %v1054 = vpop.f32.mrf.mxu0
    %v1055 = vadd.f32 0.0, %v1054
    %v1056 = vpop.f32.mrf.mxu0
    %1057 = vdwg.mxu0
    %1058 = vrot.lane.b32.xlu0 %v1013, 112
    %v1059 = vpop.permute.xlu0 %1058
    %1060 = vrot.lane.b32.xlu0 %v1013, 80
    %v1061 = vpop.permute.xlu0 %1060
    %v1063 = vsel %vm147, %v1059, 0
    %v1066 = vsel %vm147, %v1061, 0
    %1068 = vmatpush.bf16.xpose.msra.mxu0 0
    %1069 = vmatpush.bf16.xpose.msra.mxu0 0
    %1070 = vmatpush.bf16.xpose.msra.mxu0 0
    %1071 = vmatpush.bf16.xpose.msra.mxu0 0
    %1072 = vmatpush.bf16.xpose.msra.mxu0 0
    %1073 = vmatpush.bf16.xpose.msra.mxu0 0
    %1074 = vmatpush.bf16.xpose.msra.mxu0 0
    %1075 = vmatpush.bf16.xpose.msra.mxu0 %v1066
    %1076 = vmatmul.bf16.gmra.mxu0 %v1063
    %v1077 = vpop.f32.mrf.mxu0
    %v1078 = vadd.f32 0.0, %v1077
    %v1079 = vpop.f32.mrf.mxu0
    %1080 = vdwg.mxu0
    %1081 = vrot.lane.b32.xlu0 %v1013, 104
    %v1082 = vpop.permute.xlu0 %1081
    %1083 = vrot.lane.b32.xlu0 %v1013, 72
    %v1084 = vpop.permute.xlu0 %1083
    %v1086 = vsel %vm147, %v1082, 0
    %v1089 = vsel %vm147, %v1084, 0
    %1091 = vmatpush.bf16.xpose.msra.mxu0 0
    %1092 = vmatpush.bf16.xpose.msra.mxu0 0
    %1093 = vmatpush.bf16.xpose.msra.mxu0 0
    %1094 = vmatpush.bf16.xpose.msra.mxu0 0
    %1095 = vmatpush.bf16.xpose.msra.mxu0 0
    %1096 = vmatpush.bf16.xpose.msra.mxu0 0
    %1097 = vmatpush.bf16.xpose.msra.mxu0 0
    %1098 = vmatpush.bf16.xpose.msra.mxu0 %v1089
    %1099 = vmatmul.bf16.gmra.mxu0 %v1086
    %v1100 = vpop.f32.mrf.mxu0
    %v1101 = vadd.f32 0.0, %v1100
    %v1102 = vpop.f32.mrf.mxu0
    %1103 = vdwg.mxu0
    %v1105 = vunpack.c.l.b16 %v1010
    %v1106 = vpack.c.b16 %v1105, %v1105
    %1107 = vrot.lane.b32.xlu0 %v1106, 96
    %v1108 = vpop.permute.xlu0 %1107
    %v1110 = vsel %vm147, %v1010, 0
    %v1113 = vsel %vm147, %v1108, 0
    %1115 = vmatpush.bf16.xpose.msra.mxu0 0
    %1116 = vmatpush.bf16.xpose.msra.mxu0 0
    %1117 = vmatpush.bf16.xpose.msra.mxu0 0
    %1118 = vmatpush.bf16.xpose.msra.mxu0 0
    %1119 = vmatpush.bf16.xpose.msra.mxu0 0
    %1120 = vmatpush.bf16.xpose.msra.mxu0 0
    %1121 = vmatpush.bf16.xpose.msra.mxu0 0
    %1122 = vmatpush.bf16.xpose.msra.mxu0 %v1113
    %1123 = vmatmul.bf16.gmra.mxu0 %v1110
    %v1124 = vpop.f32.mrf.mxu0
    %v1125 = vadd.f32 0.0, %v1124
    %v1126 = vpop.f32.mrf.mxu0
    %1127 = vdwg.mxu0
    %1128 = vrot.lane.b32.xlu0 %v1106, 120
    %v1129 = vpop.permute.xlu0 %1128
    %1130 = vrot.lane.b32.xlu0 %v1106, 88
    %v1131 = vpop.permute.xlu0 %1130
    %v1133 = vsel %vm147, %v1129, 0
    %v1136 = vsel %vm147, %v1131, 0
    %1138 = vmatpush.bf16.xpose.msra.mxu0 0
    %1139 = vmatpush.bf16.xpose.msra.mxu0 0
    %1140 = vmatpush.bf16.xpose.msra.mxu0 0
    %1141 = vmatpush.bf16.xpose.msra.mxu0 0
    %1142 = vmatpush.bf16.xpose.msra.mxu0 0
    %1143 = vmatpush.bf16.xpose.msra.mxu0 0
    %1144 = vmatpush.bf16.xpose.msra.mxu0 0
    %1145 = vmatpush.bf16.xpose.msra.mxu0 %v1136
    %1146 = vmatmul.bf16.gmra.mxu0 %v1133
    %v1147 = vpop.f32.mrf.mxu0
    %v1148 = vadd.f32 0.0, %v1147
    %v1149 = vpop.f32.mrf.mxu0
    %1150 = vdwg.mxu0
    %1151 = vrot.lane.b32.xlu0 %v1106, 112
    %v1152 = vpop.permute.xlu0 %1151
    %1153 = vrot.lane.b32.xlu0 %v1106, 80
    %v1154 = vpop.permute.xlu0 %1153
    %v1156 = vsel %vm147, %v1152, 0
    %v1159 = vsel %vm147, %v1154, 0
    %1161 = vmatpush.bf16.xpose.msra.mxu0 0
    %1162 = vmatpush.bf16.xpose.msra.mxu0 0
    %1163 = vmatpush.bf16.xpose.msra.mxu0 0
    %1164 = vmatpush.bf16.xpose.msra.mxu0 0
    %1165 = vmatpush.bf16.xpose.msra.mxu0 0
    %1166 = vmatpush.bf16.xpose.msra.mxu0 0
    %1167 = vmatpush.bf16.xpose.msra.mxu0 0
    %1168 = vmatpush.bf16.xpose.msra.mxu0 %v1159
    %1169 = vmatmul.bf16.gmra.mxu0 %v1156
    %v1170 = vpop.f32.mrf.mxu0
    %v1171 = vadd.f32 0.0, %v1170
    %v1172 = vpop.f32.mrf.mxu0
    %1173 = vdwg.mxu0
    %1174 = vrot.lane.b32.xlu0 %v1106, 104
    %v1175 = vpop.permute.xlu0 %1174
    %1176 = vrot.lane.b32.xlu0 %v1106, 72
    %v1177 = vpop.permute.xlu0 %1176
    %v1179 = vsel %vm147, %v1175, 0
    %v1182 = vsel %vm147, %v1177, 0
    %1184 = vmatpush.bf16.xpose.msra.mxu0 0
    %1185 = vmatpush.bf16.xpose.msra.mxu0 0
    %1186 = vmatpush.bf16.xpose.msra.mxu0 0
    %1187 = vmatpush.bf16.xpose.msra.mxu0 0
    %1188 = vmatpush.bf16.xpose.msra.mxu0 0
    %1189 = vmatpush.bf16.xpose.msra.mxu0 0
    %1190 = vmatpush.bf16.xpose.msra.mxu0 0
    %1191 = vmatpush.bf16.xpose.msra.mxu0 %v1182
    %1192 = vmatmul.bf16.gmra.mxu0 %v1179
    %v1193 = vpop.f32.mrf.mxu0
    %v1194 = vadd.f32 0.0, %v1193
    %v1195 = vpop.f32.mrf.mxu0
    %1196 = vdwg.mxu0
    %v1197 = vmul.f32 %v1032, 0.35355338
    %v1198 = vmul.f32 %v1055, 0.35355338
    %v1199 = vmul.f32 %v1078, 0.35355338
    %v1200 = vmul.f32 %v1101, 0.35355338
    %v1201 = vmul.f32 %v1125, 0.35355338
    %v1202 = vmul.f32 %v1148, 0.35355338
    %v1203 = vmul.f32 %v1171, 0.35355338
    %v1204 = vmul.f32 %v1194, 0.35355338
    %v1205 = vadd.f32 %v1197, %v24
    %v1206 = vadd.f32 %v1198, %v25
    %v1207 = vadd.f32 %v1199, %v26
    %v1208 = vadd.f32 %v1200, %v27
    %v1209 = vadd.f32 %v1201, %v28
    %v1210 = vadd.f32 %v1202, %v29
    %v1211 = vadd.f32 %v1203, %v30
    %v1212 = vadd.f32 %v1204, %v31
    %v1213 = vsel %vm147, %v1205, -inf
    %1214 = vmax.xlane.f32.xlu0 %v1213
    %v1215 = vpop.xlane.xlu0 %1214
    %v1216 = vsel %vm147, %v1206, -inf
    %1217 = vmax.xlane.f32.xlu0 %v1216
    %v1218 = vpop.xlane.xlu0 %1217
    %v1219 = vsel %vm147, %v1207, -inf
    %1220 = vmax.xlane.f32.xlu0 %v1219
    %v1221 = vpop.xlane.xlu0 %1220
    %v1222 = vsel %vm147, %v1208, -inf
    %1223 = vmax.xlane.f32.xlu0 %v1222
    %v1224 = vpop.xlane.xlu0 %1223
    %v1225 = vsel %vm147, %v1209, -inf
    %1226 = vmax.xlane.f32.xlu0 %v1225
    %v1227 = vpop.xlane.xlu0 %1226
    %v1228 = vsel %vm147, %v1210, -inf
    %1229 = vmax.xlane.f32.xlu0 %v1228
    %v1230 = vpop.xlane.xlu0 %1229
    %v1231 = vsel %vm147, %v1211, -inf
    %1232 = vmax.xlane.f32.xlu0 %v1231
    %v1233 = vpop.xlane.xlu0 %1232
    %v1234 = vsel %vm147, %v1212, -inf
    %1235 = vmax.xlane.f32.xlu0 %v1234
    %v1236 = vpop.xlane.xlu0 %1235
    %v1237 = vsub.f32 %v1205, %v1215
    %v1238 = vsub.f32 %v1206, %v1218
    %v1239 = vsub.f32 %v1207, %v1221
    %v1240 = vsub.f32 %v1208, %v1224
    %v1241 = vsub.f32 %v1209, %v1227
    %v1242 = vsub.f32 %v1210, %v1230
    %v1243 = vsub.f32 %v1211, %v1233
    %v1244 = vsub.f32 %v1212, %v1236
    %v1245 = vmul.f32 %v1237, 1.442695
    %v1246 = vpow.pop %v1245
    %v1247 = vmul.f32 %v1238, 1.442695
    %v1248 = vpow.pop %v1247
    %v1249 = vmul.f32 %v1239, 1.442695
    %v1250 = vpow.pop %v1249
    %v1251 = vmul.f32 %v1240, 1.442695
    %v1252 = vpow.pop %v1251
    %v1253 = vmul.f32 %v1241, 1.442695
    %v1254 = vpow.pop %v1253
    %v1255 = vmul.f32 %v1242, 1.442695
    %v1256 = vpow.pop %v1255
    %v1257 = vmul.f32 %v1243, 1.442695
    %v1258 = vpow.pop %v1257
    %v1259 = vmul.f32 %v1244, 1.442695
    %v1260 = vpow.pop %v1259
    %v1261 = vsel %vm147, %v1246, 0.0
    %1262 = vadd.xlane.f32.xlu0 %v1261
    %v1263 = vpop.xlane.xlu0 %1262
    %v1264 = vsel %vm147, %v1248, 0.0
    %1265 = vadd.xlane.f32.xlu0 %v1264
    %v1266 = vpop.xlane.xlu0 %1265
    %v1267 = vsel %vm147, %v1250, 0.0
    %1268 = vadd.xlane.f32.xlu0 %v1267
    %v1269 = vpop.xlane.xlu0 %1268
    %v1270 = vsel %vm147, %v1252, 0.0
    %1271 = vadd.xlane.f32.xlu0 %v1270
    %v1272 = vpop.xlane.xlu0 %1271
    %v1273 = vsel %vm147, %v1254, 0.0
    %1274 = vadd.xlane.f32.xlu0 %v1273
    %v1275 = vpop.xlane.xlu0 %1274
    %v1276 = vsel %vm147, %v1256, 0.0
    %1277 = vadd.xlane.f32.xlu0 %v1276
    %v1278 = vpop.xlane.xlu0 %1277
    %v1279 = vsel %vm147, %v1258, 0.0
    %1280 = vadd.xlane.f32.xlu0 %v1279
    %v1281 = vpop.xlane.xlu0 %1280
    %v1282 = vsel %vm147, %v1260, 0.0
    %1283 = vadd.xlane.f32.xlu0 %v1282
    %v1284 = vpop.xlane.xlu0 %1283
    %v1285 = vrcp.pop %v1263
    %v1286 = vmul.f32 %v1263, %v1285
    %v1287 = vsub.f32 1.0, %v1286
    %v1288 = vmul.f32 %v1285, %v1287
    %v1289 = vadd.f32 %v1285, %v1288
    %vm1290 = vweird.f32 %v1263
    %vm1291 = vweird.f32 %v1285
    %vm1292 = vmor %vm1290, %vm1291
    %v1293 = vsel %vm1292, %v1285, %v1289
    %v1294 = vand.u32 2147483647, %v1263
    %vm1295 = vcmp.eq.f32.partialorder %v1294, 8.507059e+37
    %v1296 = vand.u32 %v1263, 2147483648
    %v1297 = vor.u32 1.1754944e-38, %v1296
    %v1298 = vsel %vm1295, %v1297, %v1293
    %v1299 = vrcp.pop %v1266
    %v1300 = vmul.f32 %v1266, %v1299
    %v1301 = vsub.f32 1.0, %v1300
    %v1302 = vmul.f32 %v1299, %v1301
    %v1303 = vadd.f32 %v1299, %v1302
    %vm1304 = vweird.f32 %v1266
    %vm1305 = vweird.f32 %v1299
    %vm1306 = vmor %vm1304, %vm1305
    %v1307 = vsel %vm1306, %v1299, %v1303
    %v1308 = vand.u32 2147483647, %v1266
    %vm1309 = vcmp.eq.f32.partialorder %v1308, 8.507059e+37
    %v1310 = vand.u32 %v1266, 2147483648
    %v1311 = vor.u32 1.1754944e-38, %v1310
    %v1312 = vsel %vm1309, %v1311, %v1307
    %v1313 = vrcp.pop %v1269
    %v1314 = vmul.f32 %v1269, %v1313
    %v1315 = vsub.f32 1.0, %v1314
    %v1316 = vmul.f32 %v1313, %v1315
    %v1317 = vadd.f32 %v1313, %v1316
    %vm1318 = vweird.f32 %v1269
    %vm1319 = vweird.f32 %v1313
    %vm1320 = vmor %vm1318, %vm1319
    %v1321 = vsel %vm1320, %v1313, %v1317
    %v1322 = vand.u32 2147483647, %v1269
    %vm1323 = vcmp.eq.f32.partialorder %v1322, 8.507059e+37
    %v1324 = vand.u32 %v1269, 2147483648
    %v1325 = vor.u32 1.1754944e-38, %v1324
    %v1326 = vsel %vm1323, %v1325, %v1321
    %v1327 = vrcp.pop %v1272
    %v1328 = vmul.f32 %v1272, %v1327
    %v1329 = vsub.f32 1.0, %v1328
    %v1330 = vmul.f32 %v1327, %v1329
    %v1331 = vadd.f32 %v1327, %v1330
    %vm1332 = vweird.f32 %v1272
    %vm1333 = vweird.f32 %v1327
    %vm1334 = vmor %vm1332, %vm1333
    %v1335 = vsel %vm1334, %v1327, %v1331
    %v1336 = vand.u32 2147483647, %v1272
    %vm1337 = vcmp.eq.f32.partialorder %v1336, 8.507059e+37
    %v1338 = vand.u32 %v1272, 2147483648
    %v1339 = vor.u32 1.1754944e-38, %v1338
    %v1340 = vsel %vm1337, %v1339, %v1335
    %v1341 = vrcp.pop %v1275
    %v1342 = vmul.f32 %v1275, %v1341
    %v1343 = vsub.f32 1.0, %v1342
    %v1344 = vmul.f32 %v1341, %v1343
    %v1345 = vadd.f32 %v1341, %v1344
    %vm1346 = vweird.f32 %v1275
    %vm1347 = vweird.f32 %v1341
    %vm1348 = vmor %vm1346, %vm1347
    %v1349 = vsel %vm1348, %v1341, %v1345
    %v1350 = vand.u32 2147483647, %v1275
    %vm1351 = vcmp.eq.f32.partialorder %v1350, 8.507059e+37
    %v1352 = vand.u32 %v1275, 2147483648
    %v1353 = vor.u32 1.1754944e-38, %v1352
    %v1354 = vsel %vm1351, %v1353, %v1349
    %v1355 = vrcp.pop %v1278
    %v1356 = vmul.f32 %v1278, %v1355
    %v1357 = vsub.f32 1.0, %v1356
    %v1358 = vmul.f32 %v1355, %v1357
    %v1359 = vadd.f32 %v1355, %v1358
    %vm1360 = vweird.f32 %v1278
    %vm1361 = vweird.f32 %v1355
    %vm1362 = vmor %vm1360, %vm1361
    %v1363 = vsel %vm1362, %v1355, %v1359
    %v1364 = vand.u32 2147483647, %v1278
    %vm1365 = vcmp.eq.f32.partialorder %v1364, 8.507059e+37
    %v1366 = vand.u32 %v1278, 2147483648
    %v1367 = vor.u32 1.1754944e-38, %v1366
    %v1368 = vsel %vm1365, %v1367, %v1363
    %v1369 = vrcp.pop %v1281
    %v1370 = vmul.f32 %v1281, %v1369
    %v1371 = vsub.f32 1.0, %v1370
    %v1372 = vmul.f32 %v1369, %v1371
    %v1373 = vadd.f32 %v1369, %v1372
    %vm1374 = vweird.f32 %v1281
    %vm1375 = vweird.f32 %v1369
    %vm1376 = vmor %vm1374, %vm1375
    %v1377 = vsel %vm1376, %v1369, %v1373
    %v1378 = vand.u32 2147483647, %v1281
    %vm1379 = vcmp.eq.f32.partialorder %v1378, 8.507059e+37
    %v1380 = vand.u32 %v1281, 2147483648
    %v1381 = vor.u32 1.1754944e-38, %v1380
    %v1382 = vsel %vm1379, %v1381, %v1377
    %v1383 = vrcp.pop %v1284
    %v1384 = vmul.f32 %v1284, %v1383
    %v1385 = vsub.f32 1.0, %v1384
    %v1386 = vmul.f32 %v1383, %v1385
    %v1387 = vadd.f32 %v1383, %v1386
    %vm1388 = vweird.f32 %v1284
    %vm1389 = vweird.f32 %v1383
    %vm1390 = vmor %vm1388, %vm1389
    %v1391 = vsel %vm1390, %v1383, %v1387
    %v1392 = vand.u32 2147483647, %v1284
    %vm1393 = vcmp.eq.f32.partialorder %v1392, 8.507059e+37
    %v1394 = vand.u32 %v1284, 2147483648
    %v1395 = vor.u32 1.1754944e-38, %v1394
    %v1396 = vsel %vm1393, %v1395, %v1391
    %v1397 = vmul.f32 %v1246, %v1298
    %v1398 = vmul.f32 %v1248, %v1312
    %v1399 = vmul.f32 %v1250, %v1326
    %v1400 = vmul.f32 %v1252, %v1340
    %v1401 = vmul.f32 %v1254, %v1354
    %v1402 = vmul.f32 %v1256, %v1368
    %v1403 = vmul.f32 %v1258, %v1382
    %v1404 = vmul.f32 %v1260, %v1396
    %v1405 = vpack.c.bf16 %v1397, %v1397
    %v1406 = vpack.c.bf16 %v1398, %v1398
    %v1407 = vpack.c.bf16 %v1399, %v1399
    %v1408 = vpack.c.bf16 %v1400, %v1400
    %v1409 = vpack.c.bf16 %v1401, %v1401
    %v1410 = vpack.c.bf16 %v1402, %v1402
    %v1411 = vpack.c.bf16 %v1403, %v1403
    %v1412 = vpack.c.bf16 %v1404, %v1404
    %1413 = vrot.lane.b32.xlu0 %v1013, 64
    %v1414 = vpop.permute.xlu0 %1413
    %v1416 = vsel %vm147, %v1405, 0
    %v1419 = vsel %vm550, %v1414, 0
    %1421 = vmatpush.bf16.msra.mxu0 0
    %1422 = vmatpush.bf16.msra.mxu0 0
    %1423 = vmatpush.bf16.msra.mxu0 0
    %1424 = vmatpush.bf16.msra.mxu0 0
    %1425 = vmatpush.bf16.msra.mxu0 0
    %1426 = vmatpush.bf16.msra.mxu0 0
    %1427 = vmatpush.bf16.msra.mxu0 0
    %1428 = vmatpush.bf16.msra.mxu0 %v1419
    %1429 = vmatmul.bf16.gmra.mxu0 %v1416
    %v1430 = vpop.f32.mrf.mxu0
    %v1431 = vadd.f32 0.0, %v1430
    %v1432 = vpop.f32.mrf.mxu0
    %1433 = vdwg.mxu0
    %1434 = vrot.lane.b32.xlu0 %v1013, 56
    %v1435 = vpop.permute.xlu0 %1434
    %v1437 = vsel %vm147, %v1406, 0
    %v1440 = vsel %vm550, %v1435, 0
    %1442 = vmatpush.bf16.msra.mxu0 0
    %1443 = vmatpush.bf16.msra.mxu0 0
    %1444 = vmatpush.bf16.msra.mxu0 0
    %1445 = vmatpush.bf16.msra.mxu0 0
    %1446 = vmatpush.bf16.msra.mxu0 0
    %1447 = vmatpush.bf16.msra.mxu0 0
    %1448 = vmatpush.bf16.msra.mxu0 0
    %1449 = vmatpush.bf16.msra.mxu0 %v1440
    %1450 = vmatmul.bf16.gmra.mxu0 %v1437
    %v1451 = vpop.f32.mrf.mxu0
    %v1452 = vadd.f32 0.0, %v1451
    %v1453 = vpop.f32.mrf.mxu0
    %1454 = vdwg.mxu0
    %1455 = vrot.lane.b32.xlu0 %v1013, 48
    %v1456 = vpop.permute.xlu0 %1455
    %v1458 = vsel %vm147, %v1407, 0
    %v1461 = vsel %vm550, %v1456, 0
    %1463 = vmatpush.bf16.msra.mxu0 0
    %1464 = vmatpush.bf16.msra.mxu0 0
    %1465 = vmatpush.bf16.msra.mxu0 0
    %1466 = vmatpush.bf16.msra.mxu0 0
    %1467 = vmatpush.bf16.msra.mxu0 0
    %1468 = vmatpush.bf16.msra.mxu0 0
    %1469 = vmatpush.bf16.msra.mxu0 0
    %1470 = vmatpush.bf16.msra.mxu0 %v1461
    %1471 = vmatmul.bf16.gmra.mxu0 %v1458
    %v1472 = vpop.f32.mrf.mxu0
    %v1473 = vadd.f32 0.0, %v1472
    %v1474 = vpop.f32.mrf.mxu0
    %1475 = vdwg.mxu0
    %1476 = vrot.lane.b32.xlu0 %v1013, 40
    %v1477 = vpop.permute.xlu0 %1476
    %v1479 = vsel %vm147, %v1408, 0
    %v1482 = vsel %vm550, %v1477, 0
    %1484 = vmatpush.bf16.msra.mxu0 0
    %1485 = vmatpush.bf16.msra.mxu0 0
    %1486 = vmatpush.bf16.msra.mxu0 0
    %1487 = vmatpush.bf16.msra.mxu0 0
    %1488 = vmatpush.bf16.msra.mxu0 0
    %1489 = vmatpush.bf16.msra.mxu0 0
    %1490 = vmatpush.bf16.msra.mxu0 0
    %1491 = vmatpush.bf16.msra.mxu0 %v1482
    %1492 = vmatmul.bf16.gmra.mxu0 %v1479
    %v1493 = vpop.f32.mrf.mxu0
    %v1494 = vadd.f32 0.0, %v1493
    %v1495 = vpop.f32.mrf.mxu0
    %1496 = vdwg.mxu0
    %1498 = vrot.lane.b32.xlu0 %v1452, 8
    %v1499 = vpop.permute.xlu0 %1498
    %1502 = vrot.lane.b32.xlu0 %v1473, 16
    %v1503 = vpop.permute.xlu0 %1502
    %1506 = vrot.lane.b32.xlu0 %v1494, 24
    %v1507 = vpop.permute.xlu0 %1506
    %v1509 = vsel %vm147, %v1431, %v1499
    %v1510 = vsel %vm643, %v1509, %v1503
    %v1511 = vsel %vm645, %v1510, %v1507
    %1512 = vrot.lane.b32.xlu0 %v1106, 64
    %v1513 = vpop.permute.xlu0 %1512
    %v1515 = vsel %vm147, %v1409, 0
    %v1518 = vsel %vm550, %v1513, 0
    %1520 = vmatpush.bf16.msra.mxu0 0
    %1521 = vmatpush.bf16.msra.mxu0 0
    %1522 = vmatpush.bf16.msra.mxu0 0
    %1523 = vmatpush.bf16.msra.mxu0 0
    %1524 = vmatpush.bf16.msra.mxu0 0
    %1525 = vmatpush.bf16.msra.mxu0 0
    %1526 = vmatpush.bf16.msra.mxu0 0
    %1527 = vmatpush.bf16.msra.mxu0 %v1518
    %1528 = vmatmul.bf16.gmra.mxu0 %v1515
    %v1529 = vpop.f32.mrf.mxu0
    %v1530 = vadd.f32 0.0, %v1529
    %v1531 = vpop.f32.mrf.mxu0
    %1532 = vdwg.mxu0
    %1533 = vrot.lane.b32.xlu0 %v1106, 56
    %v1534 = vpop.permute.xlu0 %1533
    %v1536 = vsel %vm147, %v1410, 0
    %v1539 = vsel %vm550, %v1534, 0
    %1541 = vmatpush.bf16.msra.mxu0 0
    %1542 = vmatpush.bf16.msra.mxu0 0
    %1543 = vmatpush.bf16.msra.mxu0 0
    %1544 = vmatpush.bf16.msra.mxu0 0
    %1545 = vmatpush.bf16.msra.mxu0 0
    %1546 = vmatpush.bf16.msra.mxu0 0
    %1547 = vmatpush.bf16.msra.mxu0 0
    %1548 = vmatpush.bf16.msra.mxu0 %v1539
    %1549 = vmatmul.bf16.gmra.mxu0 %v1536
    %v1550 = vpop.f32.mrf.mxu0
    %v1551 = vadd.f32 0.0, %v1550
    %v1552 = vpop.f32.mrf.mxu0
    %1553 = vdwg.mxu0
    %1554 = vrot.lane.b32.xlu0 %v1106, 48
    %v1555 = vpop.permute.xlu0 %1554
    %v1557 = vsel %vm147, %v1411, 0
    %v1560 = vsel %vm550, %v1555, 0
    %1562 = vmatpush.bf16.msra.mxu0 0
    %1563 = vmatpush.bf16.msra.mxu0 0
    %1564 = vmatpush.bf16.msra.mxu0 0
    %1565 = vmatpush.bf16.msra.mxu0 0
    %1566 = vmatpush.bf16.msra.mxu0 0
    %1567 = vmatpush.bf16.msra.mxu0 0
    %1568 = vmatpush.bf16.msra.mxu0 0
    %1569 = vmatpush.bf16.msra.mxu0 %v1560
    %1570 = vmatmul.bf16.gmra.mxu0 %v1557
    %v1571 = vpop.f32.mrf.mxu0
    %v1572 = vadd.f32 0.0, %v1571
    %v1573 = vpop.f32.mrf.mxu0
    %1574 = vdwg.mxu0
    %1575 = vrot.lane.b32.xlu0 %v1106, 40
    %v1576 = vpop.permute.xlu0 %1575
    %v1578 = vsel %vm147, %v1412, 0
    %v1581 = vsel %vm550, %v1576, 0
    %1583 = vmatpush.bf16.msra.mxu0 0
    %1584 = vmatpush.bf16.msra.mxu0 0
    %1585 = vmatpush.bf16.msra.mxu0 0
    %1586 = vmatpush.bf16.msra.mxu0 0
    %1587 = vmatpush.bf16.msra.mxu0 0
    %1588 = vmatpush.bf16.msra.mxu0 0
    %1589 = vmatpush.bf16.msra.mxu0 0
    %1590 = vmatpush.bf16.msra.mxu0 %v1581
    %1591 = vmatmul.bf16.gmra.mxu0 %v1578
    %v1592 = vpop.f32.mrf.mxu0
    %v1593 = vadd.f32 0.0, %v1592
    %v1594 = vpop.f32.mrf.mxu0
    %1595 = vdwg.mxu0
    %1597 = vrot.lane.b32.xlu0 %v1551, 8
    %v1598 = vpop.permute.xlu0 %1597
    %1601 = vrot.lane.b32.xlu0 %v1572, 16
    %v1602 = vpop.permute.xlu0 %1601
    %1605 = vrot.lane.b32.xlu0 %v1593, 24
    %v1606 = vpop.permute.xlu0 %1605
    %v1608 = vsel %vm147, %v1530, %v1598
    %v1609 = vsel %vm643, %v1608, %v1602
    %v1610 = vsel %vm645, %v1609, %v1606
    %v1611 = vpack.c.bf16 %v1610, %v1511
    %1612 = vrot.lane.b32.xlu0 %v988, 32
    %v1613 = vpop.permute.xlu0 %1612
    %1614 = vrot.lane.b32.xlu0 %v989, 32
    %v1615 = vpop.permute.xlu0 %1614
    %1619 = vrot.lane.b32.xlu0 %v979, 32
    %v1620 = vpop.permute.xlu0 %1619
    %v1623 = vsel %vm48, %v1611, 0
    %1625 = vmatpush.bf16.msra.mxu0 0
    %1626 = vmatpush.bf16.msra.mxu0 0
    %1627 = vmatpush.bf16.msra.mxu0 0
    %1628 = vmatpush.bf16.msra.mxu0 0
    %1629 = vmatpush.bf16.msra.mxu0 0
    %1630 = vmatpush.bf16.msra.mxu0 0
    %1631 = vmatpush.bf16.msra.mxu0 %v1615
    %1632 = vmatpush.bf16.msra.mxu0 %v1613
    %1633 = vmatmul.bf16.gmra.mxu0 %v1623
    %v1634 = vpop.f32.mrf.mxu0
    %v1635 = vadd.f32 %v1620, %v1634
    %v1636 = vpop.f32.mrf.mxu0
    %v1637 = vadd.f32 %v1620, %v1636
    %1638 = vdwg.mxu0
    %v1639 = vadd.f32 %v907, %v1635
    %v1640 = vadd.f32 %v908, %v1637
    %v1641 = vsel %vm48, %v1639, 0.0
    %1642 = vadd.xlane.f32.xlu0 %v1641
    %v1643 = vpop.xlane.xlu0 %1642
    %v1644 = vsel %vm48, %v1640, 0.0
    %1645 = vadd.xlane.f32.xlu0 %v1644
    %v1646 = vpop.xlane.xlu0 %1645
    %v1647 = vmul.f32 %v1643, %v61
    %v1648 = vmul.f32 %v1646, %v61
    %v1649 = vsub.f32 %v1639, %v1647
    %v1650 = vsub.f32 %v1640, %v1648
    %v1651 = vmul.f32 %v1649, %v1649
    %v1652 = vmul.f32 %v1650, %v1650
    %v1653 = vsel %vm48, %v1651, 0.0
    %1654 = vadd.xlane.f32.xlu0 %v1653
    %v1655 = vpop.xlane.xlu0 %1654
    %v1656 = vsel %vm48, %v1652, 0.0
    %1657 = vadd.xlane.f32.xlu0 %v1656
    %v1658 = vpop.xlane.xlu0 %1657
    %v1659 = vmul.f32 %v1655, %v61
    %v1660 = vmul.f32 %v1658, %v61
    %v1661 = vadd.f32 %v1659, 1e-05
    %v1662 = vadd.f32 %v1660, 1e-05
    %v1663 = vrsqrt.pop %v1661
    %v1664 = vmul.f32 %v1663, %v1661
    %v1665 = vmul.f32 %v1664, %v1663
    %v1666 = vmul.f32 0.5, %v1665
    %v1667 = vsub.f32 1.5, %v1666
    %v1668 = vmul.f32 %v1663, %v1667
    %vm1669 = vweird.f32 %v1661
    %vm1670 = vweird.f32 %v1663
    %vm1671 = vmor %vm1669, %vm1670
    %v1672 = vsel %vm1671, %v1663, %v1668
    %v1673 = vrsqrt.pop %v1662
    %v1674 = vmul.f32 %v1673, %v1662
    %v1675 = vmul.f32 %v1674, %v1673
    %v1676 = vmul.f32 0.5, %v1675
    %v1677 = vsub.f32 1.5, %v1676
    %v1678 = vmul.f32 %v1673, %v1677
    %vm1679 = vweird.f32 %v1662
    %vm1680 = vweird.f32 %v1673
    %vm1681 = vmor %vm1679, %vm1680
    %v1682 = vsel %vm1681, %v1673, %v1678
    %v1683 = vmul.f32 %v1649, %v1672
    %v1684 = vmul.f32 %v1650, %v1682
    %1685 = vrot.lane.b32.xlu0 %v969, 64
    %v1686 = vpop.permute.xlu0 %1685
    %v1688 = vmul.f32 %v1683, %v1686
    %v1689 = vmul.f32 %v1684, %v1686
    %1690 = vrot.lane.b32.xlu0 %v969, 32
    %v1691 = vpop.permute.xlu0 %1690
    %v1693 = vadd.f32 %v1688, %v1691
    %v1694 = vadd.f32 %v1689, %v1691
    %v1695 = vpack.c.bf16 %v1694, %v1693
    %v1696 = vperm.slane %v911, 0
    %v1701 = vunpack.c.l.b16 %v917
    %v1702 = vunpack.c.l.b16 %v918
    %v1703 = vunpack.c.l.b16 %v919
    %v1704 = vunpack.c.l.b16 %v920
    %v1705 = vpack.c.b16 %v1702, %v1701
    %v1706 = vpack.c.b16 %v1704, %v1703
    %v1710 = vsel %vm48, %v1695, 0
    %1712 = vmatpush.bf16.msra.mxu0 0
    %1713 = vmatpush.bf16.msra.mxu0 0
    %1714 = vmatpush.bf16.msra.mxu0 0
    %1715 = vmatpush.bf16.msra.mxu0 0
    %1716 = vmatpush.bf16.msra.mxu0 0
    %1717 = vmatpush.bf16.msra.mxu0 0
    %1718 = vmatpush.bf16.msra.mxu0 %v1706
    %1719 = vmatpush.bf16.msra.mxu0 %v1705
    %1720 = vmatmul.bf16.gmra.mxu0 %v1710
    %v1721 = vpop.f32.mrf.mxu0
    %v1722 = vadd.f32 %v1696, %v1721
    %v1723 = vpop.f32.mrf.mxu0
    %v1724 = vadd.f32 %v1696, %v1723
    %1725 = vdwg.mxu0
    %v1726 = vmul.f32 %v1722, 0.5
    %v1727 = vmul.f32 %v1724, 0.5
    %v1728 = vmul.f32 %v1722, %v1722
    %v1729 = vmul.f32 %v1724, %v1724
    %v1730 = vmul.f32 %v1722, %v1728
    %v1731 = vmul.f32 %v1724, %v1729
    %v1732 = vmul.f32 %v1730, 0.044715
    %v1733 = vmul.f32 %v1731, 0.044715
    %v1734 = vadd.f32 %v1722, %v1732
    %v1735 = vadd.f32 %v1724, %v1733
    %v1736 = vmul.f32 %v1734, 0.7978846
    %v1737 = vmul.f32 %v1735, 0.7978846
    %v1738 = vtanh.pop %v1736
    %v1739 = vtanh.pop %v1737
    %v1740 = vadd.f32 %v1738, 1.0
    %v1741 = vadd.f32 %v1739, 1.0
    %v1742 = vmul.f32 %v1726, %v1740
    %v1743 = vmul.f32 %v1727, %v1741
    %v1744 = vpack.c.bf16 %v1743, %v1742
    %v1745 = vperm.slane %v912, 0
    %v1750 = vunpack.c.l.b16 %v921
    %v1751 = vunpack.c.l.b16 %v922
    %v1752 = vunpack.c.l.b16 %v923
    %v1753 = vunpack.c.l.b16 %v924
    %v1754 = vpack.c.b16 %v1751, %v1750
    %v1755 = vpack.c.b16 %v1753, %v1752
    %1758 = vmatpush.bf16.xpose.msra.mxu0 0
    %1759 = vmatpush.bf16.xpose.msra.mxu0 0
    %1760 = vmatpush.bf16.xpose.msra.mxu0 0
    %1761 = vmatpush.bf16.xpose.msra.mxu0 0
    %1762 = vmatpush.bf16.xpose.msra.mxu0 0
    %1763 = vmatpush.bf16.xpose.msra.mxu0 0
    %1764 = vmatpush.bf16.xpose.msra.mxu0 %v1755
    %1765 = vmatpush.bf16.xpose.msra.mxu0 %v1754
    %1766 = vmatmul.bf16.gmra.mxu0 %v1744
    %v1767 = vpop.f32.mrf.mxu0
    %v1768 = vadd.f32 %v1745, %v1767
    %v1769 = vpop.f32.mrf.mxu0
    %v1770 = vadd.f32 %v1745, %v1769
    %1771 = vdwg.mxu0
    %v1772 = vadd.f32 %v1639, %v1768
    %v1773 = vadd.f32 %v1640, %v1770
    %v1774 = vld [vmem:[%s4 + $0x8] sm:$0x1]
    %v1775 = vsel %vm48, %v1772, 0.0
    %1776 = vadd.xlane.f32.xlu0 %v1775
    %v1777 = vpop.xlane.xlu0 %1776
    %v1778 = vsel %vm48, %v1773, 0.0
    %1779 = vadd.xlane.f32.xlu0 %v1778
    %v1780 = vpop.xlane.xlu0 %1779
    %v1781 = vmul.f32 %v1777, %v61
    %v1782 = vmul.f32 %v1780, %v61
    %v1783 = vsub.f32 %v1772, %v1781
    %v1784 = vsub.f32 %v1773, %v1782
    %v1785 = vmul.f32 %v1783, %v1783
    %v1786 = vmul.f32 %v1784, %v1784
    %v1787 = vsel %vm48, %v1785, 0.0
    %1788 = vadd.xlane.f32.xlu0 %v1787
    %v1789 = vpop.xlane.xlu0 %1788
    %v1790 = vsel %vm48, %v1786, 0.0
    %1791 = vadd.xlane.f32.xlu0 %v1790
    %v1792 = vpop.xlane.xlu0 %1791
    %v1793 = vmul.f32 %v1789, %v61
    %v1794 = vmul.f32 %v1792, %v61
    %v1795 = vadd.f32 %v1793, 1e-05
    %v1796 = vadd.f32 %v1794, 1e-05
    %v1797 = vrsqrt.pop %v1795
    %v1798 = vmul.f32 %v1797, %v1795
    %v1799 = vmul.f32 %v1798, %v1797
    %v1800 = vmul.f32 0.5, %v1799
    %v1801 = vsub.f32 1.5, %v1800
    %v1802 = vmul.f32 %v1797, %v1801
    %vm1803 = vweird.f32 %v1795
    %vm1804 = vweird.f32 %v1797
    %vm1805 = vmor %vm1803, %vm1804
    %v1806 = vsel %vm1805, %v1797, %v1802
    %v1807 = vrsqrt.pop %v1796
    %v1808 = vmul.f32 %v1807, %v1796
    %v1809 = vmul.f32 %v1808, %v1807
    %v1810 = vmul.f32 0.5, %v1809
    %v1811 = vsub.f32 1.5, %v1810
    %v1812 = vmul.f32 %v1807, %v1811
    %vm1813 = vweird.f32 %v1796
    %vm1814 = vweird.f32 %v1807
    %vm1815 = vmor %vm1813, %vm1814
    %v1816 = vsel %vm1815, %v1807, %v1812
    %v1817 = vmul.f32 %v1783, %v1806
    %v1818 = vmul.f32 %v1784, %v1816
    %v1819 = vperm.slane %v1774, 0
    %v1820 = vmul.f32 %v1817, %v1819
    %v1821 = vmul.f32 %v1818, %v1819
    %1823 = vrot.lane.b32.xlu0 %v1819, 96
    %v1824 = vpop.permute.xlu0 %1823
    %v1826 = vadd.f32 %v1820, %v1824
    %v1827 = vadd.f32 %v1821, %v1824
    %v1828 = vpack.c.bf16 %v1827, %v1826
    %v1829 = vld [vmem:[%s2] sm:$0xf]
    %v1830 = vld [vmem:[%s2 + $0x4] sm:$0xf]
    %v1831 = vld [vmem:[%s2 + $0x8] sm:$0xf]
    %v1832 = vld [vmem:[%s2 + $0xc] sm:$0xf]
    %v1833 = vld [vmem:[%s2 + $0x10] sm:$0xf]
    %v1834 = vld [vmem:[%s2 + $0x14] sm:$0xf]
    %v1835 = vld [vmem:[%s2 + $0x18] sm:$0xf]
    %v1836 = vld [vmem:[%s2 + $0x1c] sm:$0xf]
    %v1837 = vld [vmem:[%s2 + $0x20] sm:$0xf]
    %v1838 = vld [vmem:[%s2 + $0x24] sm:$0xf]
    %v1839 = vld [vmem:[%s2 + $0x28] sm:$0xf]
    %v1840 = vld [vmem:[%s2 + $0x2c] sm:$0xf]
    %v1841 = vld [vmem:[%s2 + $0x30] sm:$0xf]
    %v1842 = vld [vmem:[%s2 + $0x34] sm:$0xf]
    %v1843 = vld [vmem:[%s2 + $0x38] sm:$0xf]
    %v1844 = vld [vmem:[%s2 + $0x3c] sm:$0xf]
    %v1861 = vunpack.c.l.b16 %v1829
    %v1862 = vunpack.c.l.b16 %v1830
    %v1863 = vunpack.c.l.b16 %v1831
    %v1864 = vunpack.c.l.b16 %v1832
    %v1865 = vunpack.c.l.b16 %v1833
    %v1866 = vunpack.c.l.b16 %v1834
    %v1867 = vunpack.c.l.b16 %v1835
    %v1868 = vunpack.c.l.b16 %v1836
    %v1869 = vunpack.c.l.b16 %v1837
    %v1870 = vunpack.c.l.b16 %v1838
    %v1871 = vunpack.c.l.b16 %v1839
    %v1872 = vunpack.c.l.b16 %v1840
    %v1873 = vunpack.c.l.b16 %v1841
    %v1874 = vunpack.c.l.b16 %v1842
    %v1875 = vunpack.c.l.b16 %v1843
    %v1876 = vunpack.c.l.b16 %v1844
    %v1877 = vpack.c.b16 %v1862, %v1861
    %v1878 = vpack.c.b16 %v1864, %v1863
    %v1879 = vpack.c.b16 %v1866, %v1865
    %v1880 = vpack.c.b16 %v1868, %v1867
    %v1881 = vpack.c.b16 %v1870, %v1869
    %v1882 = vpack.c.b16 %v1872, %v1871
    %v1883 = vpack.c.b16 %v1874, %v1873
    %v1884 = vpack.c.b16 %v1876, %v1875
    %v1886 = vsel %vm48, %v1828, 0
    %v1889 = vsel %vm48, %v1877, 0
    %v1892 = vsel %vm48, %v1878, 0
    %v1895 = vsel %vm48, %v1879, 0
    %v1898 = vsel %vm48, %v1880, 0
    %v1901 = vsel %vm48, %v1881, 0
    %v1904 = vsel %vm48, %v1882, 0
    %v1907 = vsel %vm48, %v1883, 0
    %v1910 = vsel %vm48, %v1884, 0
    %1912 = vmatpush.bf16.xpose.msra.mxu0 %v1910
    %1913 = vmatpush.bf16.xpose.msra.mxu0 %v1907
    %1914 = vmatpush.bf16.xpose.msra.mxu0 %v1904
    %1915 = vmatpush.bf16.xpose.msra.mxu0 %v1901
    %1916 = vmatpush.bf16.xpose.msra.mxu0 %v1898
    %1917 = vmatpush.bf16.xpose.msra.mxu0 %v1895
    %1918 = vmatpush.bf16.xpose.msra.mxu0 %v1892
    %1919 = vmatpush.bf16.xpose.msra.mxu0 %v1889
    %1920 = vmatmul.bf16.gmra.mxu0 %v1886
    %v1921 = vpop.f32.mrf.mxu0
    %v1922 = vadd.f32 0.0, %v1921
    %v1923 = vpop.f32.mrf.mxu0
    %v1924 = vadd.f32 0.0, %v1923
    %1925 = vdwg.mxu0
    %1926 = vst [vmem:[#allocation2] sm:$0xff] %v1922
    %1927 = vst [vmem:[#allocation2 + $0x8] sm:$0xff] %v1924
    // Predicated region
    $region22: #{gpt_forward.1} parent=1 // pred_check
      _
    $region23: #{gpt_forward.1} parent=1 // pred_check_branch
      %1929 = sbr.rel (0) target = $region25
    $region24: #{gpt_forward.1} parent=1 // pred_region
      %1931 = vsyncadd [#allocation3], 0
      %s1932 = sshll.u32 [#allocation2], 4
      %s1933 = int_to_ptr.vmem [resolvable:$true] %s1932
      %s1934 = sshll.u32 %s5, 4
      %s1935 = int_to_ptr.hbm [resolvable:$true] %s1934
      %1940 = dma.vmem_to_hbm [thread:$0]  %s1933, 256, %s1935, [#allocation3], 128, 128, 8
    $region25: #{gpt_forward.1} parent=1 // pred_fallthru
      _
    // Predicated region
    $region26: #{gpt_forward.1} parent=1 // pred_check
      _
    $region27: #{gpt_forward.1} parent=1 // pred_check_branch
      %1942 = sbr.rel (0) target = $region29
    $region28: #{gpt_forward.1} parent=1 // pred_region
      %1944 = dma.done [#allocation3], 256
    $region29: #{gpt_forward.1} parent=1 // pred_fallthru
      _
    %1945 = vsyncpa [#allocation3], 1

</llo_original>
